<compile_context>
chip_gen: v6e
topology: v6e:2x2x1
jax: 0.10.0
libtpu: 0.0.40
codegen_flags: <defaults>
</compile_context>

<pallas_src>
import jax
import jax.numpy as jnp
import numpy as np
from jax.experimental import pallas as pl
from jax.experimental.pallas import tpu as pltpu

FU_PRIMITIVES = ("fu_add", "fu_mul", "fu_max", "fu_min", "fu_concat_fc")
NUM_PRIMITIVES = len(FU_PRIMITIVES)


def _round_up(x, m):
    return ((x + m - 1) // m) * m


def _make_fu_mixed_kernel(num_branches, h):
    """Kernel args: (mixw_ref, x_0 .. x_{N-1}, wfc_ref, bfc_ref, out_ref)."""

    def kernel(mixw_ref, *refs):
        x_refs = refs[:num_branches]
        wfc_ref, bfc_ref, out_ref = refs[num_branches:]

        xs = [r[...] for r in x_refs]                       # native dtype loads

        # --- concat_fc primitive (MXU): per-branch dot accumulation over the
        #     resident weight; static 128-aligned slices, no concat temp. ---
        acc = None
        for i, xv in enumerate(xs):
            w_i = wfc_ref[pl.ds(i * h, h), :]               # static aligned slice
            ct = jnp.promote_types(xv.dtype, w_i.dtype)     # keep f32 weights f32
            part = jnp.dot(xv.astype(ct), w_i.astype(ct),
                           preferred_element_type=jnp.float32)
            acc = part if acc is None else acc + part
        f_fc = jnp.maximum(acc + bfc_ref[...].astype(jnp.float32), 0.0)

        # --- elementwise primitives (VPU): single fused pass, f32 accumulators ---
        x0 = xs[0].astype(jnp.float32)
        f_add = x0
        f_mul = x0
        f_max = x0
        f_min = x0
        for xv in xs[1:]:
            xf = xv.astype(jnp.float32)
            f_add = f_add + xf
            f_mul = f_mul * xf
            f_max = jnp.maximum(f_max, xf)
            f_min = jnp.minimum(f_min, xf)

        # --- weighted mixture (FuMixedOp.forward) ---
        out = (mixw_ref[0] * f_add
               + mixw_ref[1] * f_mul
               + mixw_ref[2] * f_max
               + mixw_ref[3] * f_min
               + mixw_ref[4] * f_fc)
        out_ref[...] = out.astype(out_ref.dtype)

    return kernel


def fu_mixed_op(x_list, weights, wfc, bfc, *, tile_b=512):
    """x_list: list of N arrays [B, H]; weights: [NUM_PRIMITIVES] architecture
    weights; wfc: [N*H, H] concat_fc weight; bfc: [1, H] concat_fc bias."""
    n = len(x_list)
    b, h = x_list[0].shape
    assert all(x.shape == (b, h) for x in x_list)
    assert weights.shape == (NUM_PRIMITIVES,)
    assert wfc.shape == (n * h, h) and bfc.shape == (1, h)

    # --- pad H to a lane-dense multiple of 128 (unmasked stores, aligned slices) ---
    hp = _round_up(h, 128)
    if hp != h:
        x_list = [jnp.pad(x, ((0, 0), (0, hp - h))) for x in x_list]
        w_blocks = [jnp.pad(wfc[i * h:(i + 1) * h, :], ((0, hp - h), (0, hp - h)))
                    for i in range(n)]
        wfc = jnp.concatenate(w_blocks, axis=0)              # [N*Hp, Hp]
        bfc = jnp.pad(bfc, ((0, 0), (0, hp - h)))

    x_item = jnp.dtype(x_list[0].dtype).itemsize
    w_item = jnp.dtype(wfc.dtype).itemsize

    # --- generation-aware VMEM budget (v5e/v6e: 128 MiB, v7x: 64 MiB per TC) ---
    try:
        info = pltpu.get_tpu_info()
        vmem_cap = int(getattr(info, "vmem_capacity_bytes", 64 << 20))
    except Exception:
        vmem_cap = 64 << 20                                   # conservative fallback
    vmem_limit = max(32 << 20, int(vmem_cap * 0.8))           # ~51 MiB v7x, ~102 MiB v6e

    def footprint(tb):
        # double-buffered branch inputs + output, single-buffered resident Wcat/bias,
        # plus f32 fc accumulator and the four f32 elementwise accumulators.
        return (2 * (n + 1) * tb * hp * x_item
                + (n * hp * hp + hp) * w_item
                + 5 * tb * hp * 4)

    # --- batch tile: large (HBM roofline), >= ~8 grid steps when B allows (so each
    #     v7x TensorCore keeps pipeline overlap), and re-derived from the VMEM cap ---
    tb = max(8, _round_up(min(tile_b, b), 8))
    if b >= 8 * 128:
        tb = min(tb, max(128, _round_up(pl.cdiv(b, 8), 8)))
    while tb > 8 and footprint(tb) > vmem_limit:
        tb = max(8, _round_up(tb // 2, 8))
    vmem_bytes = int(min(max(2 * footprint(tb), 32 << 20), vmem_limit))

    b_pad = _round_up(b, tb)
    if b_pad != b:
        x_list = [jnp.pad(x, ((0, b_pad - b), (0, 0))) for x in x_list]
    grid = (b_pad // tb,)

    x_spec = pl.BlockSpec((tb, hp), lambda i: (i, 0))
    w_spec = pl.BlockSpec((n * hp, hp), lambda i: (0, 0),
                          pipeline_mode=pl.Buffered(1))       # resident, single buffer
    bias_spec = pl.BlockSpec((1, hp), lambda i: (0, 0),
                             pipeline_mode=pl.Buffered(1))

    grid_spec = pltpu.PrefetchScalarGridSpec(
        num_scalar_prefetch=0,
        grid=grid,
        in_specs=(
            [pl.BlockSpec(memory_space=pltpu.MemorySpace.SMEM)]   # mixture weights
            + [x_spec] * n                                        # branch inputs
            + [w_spec, bias_spec]                                 # resident fc params
        ),
        out_specs=pl.BlockSpec((tb, hp), lambda i: (i, 0)),
    )

    out = pl.pallas_call(
        _make_fu_mixed_kernel(n, hp),
        out_shape=jax.ShapeDtypeStruct((b_pad, hp), x_list[0].dtype),
        grid_spec=grid_spec,
        compiler_params=pltpu.CompilerParams(
            dimension_semantics=("parallel",),       # shards batch over v7x's 2 TCs
            vmem_limit_bytes=vmem_bytes,
        ),
    )(weights.astype(jnp.float32), *x_list, wfc, bfc)

    if b_pad != b or hp != h:
        out = out[:b, :h]
    return out


def fu_mixed_ref(x_list, weights, wfc, bfc):
    """Pure-JAX reference mirroring the PyTorch FuMixedOp forward."""
    x = jnp.stack(x_list, axis=0)
    f_add = jnp.sum(x, axis=0)
    f_mul = jnp.prod(x, axis=0)
    f_max = jnp.max(x, axis=0)
    f_min = jnp.min(x, axis=0)
    cat = jnp.concatenate(x_list, axis=-1)                    # [B, N*H]
    f_fc = jnp.maximum(cat @ wfc + bfc, 0.0)
    outs = [f_add, f_mul, f_max, f_min, f_fc]
    return sum(w * o for w, o in zip(weights, outs))


if __name__ == "__main__":
    key = jax.random.PRNGKey(0)
    N, B, H = 3, 256, 128                                     # small, lane-dense demo
    k1, k2, k3, k4 = jax.random.split(key, 4)

    # fusion inputs (the x_list the module receives)
    x_list = [jax.random.normal(jax.random.fold_in(k1, i), (B, H), jnp.float32)
              for i in range(N)]
    # architecture mixture weights (softmax over primitives, as in DARTS)
    weights = jax.nn.softmax(jax.random.normal(k2, (NUM_PRIMITIVES,), jnp.float32))
    # deterministic parameters for the concat_fc primitive: Linear(N*H, H)
    wfc = 0.05 * jax.random.normal(k3, (N * H, H), jnp.float32)
    bfc = 0.01 * jax.random.normal(k4, (1, H), jnp.float32)

    out = fu_mixed_op(x_list, weights, wfc, bfc)
    out = jax.block_until_ready(out)

    ref = fu_mixed_ref(x_list, weights, wfc, bfc)
    np.testing.assert_allclose(np.asarray(out), np.asarray(ref),
                               rtol=1e-4, atol=1e-4)
    print("KERNEL_OK")
</pallas_src>

<mosaic_0001>
module attributes {stable_mosaic.version = 11 : i64} {
  func.func @kernel(%arg0: i32, %arg1: memref<5xf32, #tpu.memory_space<smem>>, %arg2: memref<256x128xf32, #tpu.memory_space<vmem>>, %arg3: memref<256x128xf32, #tpu.memory_space<vmem>>, %arg4: memref<256x128xf32, #tpu.memory_space<vmem>>, %arg5: memref<384x128xf32, #tpu.memory_space<vmem>>, %arg6: memref<1x128xf32, #tpu.memory_space<vmem>>, %arg7: memref<256x128xf32, #tpu.memory_space<vmem>>) attributes {dimension_semantics = [#tpu.dimension_semantics<parallel>], iteration_bounds = array<i64: 1>, scalar_prefetch = 0 : i64, scratch_operands = 0 : i64, tpu.core_type = #tpu.core_type<tc>, window_params = [{transform_indices = @transform_0, window_bounds = array<i64: 5>}, {transform_indices = @transform_1, window_bounds = array<i64: 256, 128>}, {transform_indices = @transform_2, window_bounds = array<i64: 256, 128>}, {transform_indices = @transform_3, window_bounds = array<i64: 256, 128>}, {pipeline_mode = #tpu.pipeline_mode<synchronous>, transform_indices = @transform_4, window_bounds = array<i64: 384, 128>}, {pipeline_mode = #tpu.pipeline_mode<synchronous>, transform_indices = @transform_5, window_bounds = array<i64: 1, 128>}, {transform_indices = @transform_6, window_bounds = array<i64: 256, 128>}]} {
    %c0 = arith.constant 0 : index
    %c0_0 = arith.constant 0 : index
    %0 = vector.load %arg2[%c0, %c0_0] : memref<256x128xf32, #tpu.memory_space<vmem>>, vector<256x128xf32>
    %c0_1 = arith.constant 0 : index
    %c0_2 = arith.constant 0 : index
    %1 = vector.load %arg3[%c0_1, %c0_2] : memref<256x128xf32, #tpu.memory_space<vmem>>, vector<256x128xf32>
    %c0_3 = arith.constant 0 : index
    %c0_4 = arith.constant 0 : index
    %2 = vector.load %arg4[%c0_3, %c0_4] : memref<256x128xf32, #tpu.memory_space<vmem>>, vector<256x128xf32>
    %c0_5 = arith.constant 0 : index
    %c0_6 = arith.constant 0 : index
    %3 = vector.load %arg5[%c0_5, %c0_6] : memref<384x128xf32, #tpu.memory_space<vmem>>, vector<128x128xf32>
    %cst = arith.constant dense<0.000000e+00> : vector<256x128xf32>
    %4 = tpu.matmul %0, %3, %cst {dimension_numbers = #tpu.dot_dimension_numbers<[1], [0], [0], [1], [0, 0, 1, 1], [], []>} : vector<256x128xf32>, vector<128x128xf32>, vector<256x128xf32> -> vector<256x128xf32>
    %c128 = arith.constant 128 : index
    %c0_7 = arith.constant 0 : index
    %5 = vector.load %arg5[%c128, %c0_7] : memref<384x128xf32, #tpu.memory_space<vmem>>, vector<128x128xf32>
    %cst_8 = arith.constant dense<0.000000e+00> : vector<256x128xf32>
    %6 = tpu.matmul %1, %5, %cst_8 {dimension_numbers = #tpu.dot_dimension_numbers<[1], [0], [0], [1], [0, 0, 1, 1], [], []>} : vector<256x128xf32>, vector<128x128xf32>, vector<256x128xf32> -> vector<256x128xf32>
    %7 = arith.addf %4, %6 : vector<256x128xf32>
    %c256 = arith.constant 256 : index
    %c0_9 = arith.constant 0 : index
    %8 = vector.load %arg5[%c256, %c0_9] : memref<384x128xf32, #tpu.memory_space<vmem>>, vector<128x128xf32>
    %cst_10 = arith.constant dense<0.000000e+00> : vector<256x128xf32>
    %9 = tpu.matmul %2, %8, %cst_10 {dimension_numbers = #tpu.dot_dimension_numbers<[1], [0], [0], [1], [0, 0, 1, 1], [], []>} : vector<256x128xf32>, vector<128x128xf32>, vector<256x128xf32> -> vector<256x128xf32>
    %10 = arith.addf %7, %9 : vector<256x128xf32>
    %c0_11 = arith.constant 0 : index
    %c0_12 = arith.constant 0 : index
    %11 = vector.load %arg6[%c0_11, %c0_12] : memref<1x128xf32, #tpu.memory_space<vmem>>, vector<1x128xf32>
    %12 = vector.broadcast %11 : vector<1x128xf32> to vector<256x128xf32>
    %13 = arith.addf %10, %12 : vector<256x128xf32>
    %cst_13 = arith.constant 0.000000e+00 : f32
    %14 = vector.broadcast %cst_13 : f32 to vector<256x128xf32>
    %15 = arith.maximumf %13, %14 : vector<256x128xf32>
    %16 = arith.addf %0, %1 : vector<256x128xf32>
    %17 = arith.mulf %0, %1 : vector<256x128xf32>
    %18 = arith.maximumf %0, %1 : vector<256x128xf32>
    %19 = arith.minimumf %0, %1 : vector<256x128xf32>
    %20 = arith.addf %16, %2 : vector<256x128xf32>
    %21 = arith.mulf %17, %2 : vector<256x128xf32>
    %22 = arith.maximumf %18, %2 : vector<256x128xf32>
    %23 = arith.minimumf %19, %2 : vector<256x128xf32>
    %c0_14 = arith.constant 0 : index
    %24 = memref.load %arg1[%c0_14] : memref<5xf32, #tpu.memory_space<smem>>
    %25 = vector.broadcast %24 : f32 to vector<256x128xf32>
    %26 = arith.mulf %25, %20 : vector<256x128xf32>
    %c1 = arith.constant 1 : index
    %27 = memref.load %arg1[%c1] : memref<5xf32, #tpu.memory_space<smem>>
    %28 = vector.broadcast %27 : f32 to vector<256x128xf32>
    %29 = arith.mulf %28, %21 : vector<256x128xf32>
    %30 = arith.addf %26, %29 : vector<256x128xf32>
    %c2 = arith.constant 2 : index
    %31 = memref.load %arg1[%c2] : memref<5xf32, #tpu.memory_space<smem>>
    %32 = vector.broadcast %31 : f32 to vector<256x128xf32>
    %33 = arith.mulf %32, %22 : vector<256x128xf32>
    %34 = arith.addf %30, %33 : vector<256x128xf32>
    %c3 = arith.constant 3 : index
    %35 = memref.load %arg1[%c3] : memref<5xf32, #tpu.memory_space<smem>>
    %36 = vector.broadcast %35 : f32 to vector<256x128xf32>
    %37 = arith.mulf %36, %23 : vector<256x128xf32>
    %38 = arith.addf %34, %37 : vector<256x128xf32>
    %c4 = arith.constant 4 : index
    %39 = memref.load %arg1[%c4] : memref<5xf32, #tpu.memory_space<smem>>
    %40 = vector.broadcast %39 : f32 to vector<256x128xf32>
    %41 = arith.mulf %40, %15 : vector<256x128xf32>
    %42 = arith.addf %38, %41 : vector<256x128xf32>
    %c0_15 = arith.constant 0 : index
    %c0_16 = arith.constant 0 : index
    %43 = vector.load %arg7[%c0_15, %c0_16] : memref<256x128xf32, #tpu.memory_space<vmem>>, vector<256x128xf32>
    tpu.vector_store %arg7[%c0_15, %c0_16], %42 {strides = array<i32>} : memref<256x128xf32, #tpu.memory_space<vmem>>, vector<256x128xf32>,
    return
  }
  func.func @transform_0(%arg0: i32) -> i32 {
    %c0_i32 = arith.constant 0 : i32
    %c0_i32_0 = arith.constant 0 : i32
    return %c0_i32 : i32
  }
  func.func @transform_1(%arg0: i32) -> (i32, i32) {
    %c0_i32 = arith.constant 0 : i32
    %c0_i32_0 = arith.constant 0 : i32
    return %arg0, %c0_i32 : i32, i32
  }
  func.func @transform_2(%arg0: i32) -> (i32, i32) {
    %c0_i32 = arith.constant 0 : i32
    %c0_i32_0 = arith.constant 0 : i32
    return %arg0, %c0_i32 : i32, i32
  }
  func.func @transform_3(%arg0: i32) -> (i32, i32) {
    %c0_i32 = arith.constant 0 : i32
    %c0_i32_0 = arith.constant 0 : i32
    return %arg0, %c0_i32 : i32, i32
  }
  func.func @transform_4(%arg0: i32) -> (i32, i32) {
    %c0_i32 = arith.constant 0 : i32
    %c0_i32_0 = arith.constant 0 : i32
    %c0_i32_1 = arith.constant 0 : i32
    return %c0_i32, %c0_i32_0 : i32, i32
  }
  func.func @transform_5(%arg0: i32) -> (i32, i32) {
    %c0_i32 = arith.constant 0 : i32
    %c0_i32_0 = arith.constant 0 : i32
    %c0_i32_1 = arith.constant 0 : i32
    return %c0_i32, %c0_i32_0 : i32, i32
  }
  func.func @transform_6(%arg0: i32) -> (i32, i32) {
    %c0_i32 = arith.constant 0 : i32
    %c0_i32_0 = arith.constant 0 : i32
    return %arg0, %c0_i32 : i32, i32
  }
}

</mosaic_0001>

<llo_original>
// kernel: tpu_custom_call.1
$region0: #{tpu_custom_call.1}
  #allocation0 [shape = 'u32[]', space=smem, size = 0x4, offset = 0x4, fixed_abs, tag = 'smem constant byte address 0x4 - core index']
  #allocation1 [shape = 'u32[144,128]{1,0:T(1,128)}', space=vmem, size = 0x12000, scoped, tag = 'internal scratch']
  %s0 = inlined_call_operand.hbm [shape: f32[5], index: 0, kind: input, shape index: {}]
  %s1 = inlined_call_operand.hbm [shape: f32[256,128], index: 1, kind: input, shape index: {}]
  %s2 = inlined_call_operand.hbm [shape: f32[256,128], index: 2, kind: input, shape index: {}]
  %s3 = inlined_call_operand.hbm [shape: f32[256,128], index: 3, kind: input, shape index: {}]
  %s4 = inlined_call_operand.hbm [shape: f32[384,128], index: 4, kind: input, shape index: {}]
  %s5 = inlined_call_operand.vmem [shape: f32[1,128], index: 5, kind: input, shape index: {}]
  %s6 = inlined_call_operand.hbm [shape: f32[256,128], index: 6, kind: output, shape index: {}]
  %s7 = sld [smem:[#allocation0]]
  $region54: #{tpu_custom_call.1} parent=0
    _
  %s9 = ssub.s32 1, %s7
  %s10 = scalar_select 0, %s9, %s7
  $region1: #{tpu_custom_call.1} parent=0
    #allocation2 [shape = 'u8[512]{0}', space=smem, size = 0x200, scoped, tag = 'input window, operand 0, single buffered']
    #allocation3 [shape = 's32[1]{0}', space=sflag, size = 0x4, scoped, tag = 'scoped memory for tpu_custom_call.1']
    #allocation4 [shape = 's32[1]{0}', space=sflag, size = 0x4, scoped, tag = 'scoped memory for tpu_custom_call.1']
    #allocation5 [shape = 's32[1]{0}', space=sflag, size = 0x4, scoped, tag = 'scoped memory for tpu_custom_call.1']
    #allocation6 [shape = 'u8[131072]{0}', space=vmem, size = 0x20000, scoped, tag = 'input window, operand 1, single buffered']
    #allocation7 [shape = 'u8[131072]{0}', space=vmem, size = 0x20000, scoped, tag = 'input window, operand 2, single buffered']
    #allocation8 [shape = 's32[1]{0}', space=sflag, size = 0x4, scoped, tag = 'scoped memory for tpu_custom_call.1']
    #allocation9 [shape = 'u8[131072]{0}', space=vmem, size = 0x20000, scoped, tag = 'input window, operand 3, single buffered']
    #allocation10 [shape = 'u8[196608]{0}', space=vmem, size = 0x30000, scoped, tag = 'input window, operand 4, single buffered']
    #allocation11 [shape = 's32[1]{0}', space=sflag, size = 0x4, scoped, tag = 'scoped memory for tpu_custom_call.1']
    #allocation12 [shape = 'u8[131072]{0}', space=vmem, size = 0x20000, scoped, tag = 'output window, operand 0, single buffered']
    %11 = vsyncpa [#allocation5], 0
    %12 = vsyncpa [#allocation3], 0
    %13 = vsyncpa [#allocation8], 0
    %14 = vsyncpa [#allocation11], 0
    %15 = vsyncpa [#allocation4], 0
    // Predicated region
    $region2: #{tpu_custom_call.1} parent=1 // pred_check
      _
    $region3: #{tpu_custom_call.1} parent=1 // pred_check_branch
      %17 = sbr.rel (0) target = $region5
    $region4: #{tpu_custom_call.1} parent=1 // pred_region
      %s19 = ssub.s32 16, 16
      %20 = vsyncadd [#allocation5], %s19
      %23 = dma.hbm_to_smem %s0, 16, [#allocation2], [#allocation5]
    $region5: #{tpu_custom_call.1} parent=1 // pred_fallthru
      _
    // Predicated region
    $region6: #{tpu_custom_call.1} parent=1 // pred_check
      _
    $region7: #{tpu_custom_call.1} parent=1 // pred_check_branch
      %25 = sbr.rel (0) target = $region9
    $region8: #{tpu_custom_call.1} parent=1 // pred_region
      %s27 = ssub.s32 4096, 4096
      %28 = vsyncadd [#allocation3], %s27
      %s29 = sshll.u32 [#allocation6], 4
      %s30 = int_to_ptr.vmem [resolvable:$true] %s29
      %35 = dma.hbm_to_vmem [thread:$0]  %s1, 4096, %s30, [#allocation3], 128, 128, 8
    $region9: #{tpu_custom_call.1} parent=1 // pred_fallthru
      _
    // Predicated region
    $region10: #{tpu_custom_call.1} parent=1 // pred_check
      _
    $region11: #{tpu_custom_call.1} parent=1 // pred_check_branch
      %37 = sbr.rel (0) target = $region13
    $region12: #{tpu_custom_call.1} parent=1 // pred_region
      %s39 = ssub.s32 4096, 4096
      %40 = vsyncadd [#allocation8], %s39
      %s41 = sshll.u32 [#allocation7], 4
      %s42 = int_to_ptr.vmem [resolvable:$true] %s41
      %47 = dma.hbm_to_vmem [thread:$0]  %s2, 4096, %s42, [#allocation8], 128, 128, 8
    $region13: #{tpu_custom_call.1} parent=1 // pred_fallthru
      _
    // Predicated region
    $region14: #{tpu_custom_call.1} parent=1 // pred_check
      _
    $region15: #{tpu_custom_call.1} parent=1 // pred_check_branch
      %49 = sbr.rel (0) target = $region17
    $region16: #{tpu_custom_call.1} parent=1 // pred_region
      %s51 = ssub.s32 4096, 4096
      %52 = vsyncadd [#allocation8], %s51
      %s53 = sshll.u32 [#allocation9], 4
      %s54 = int_to_ptr.vmem [resolvable:$true] %s53
      %59 = dma.hbm_to_vmem [thread:$0]  %s3, 4096, %s54, [#allocation8], 128, 128, 8
    $region17: #{tpu_custom_call.1} parent=1 // pred_fallthru
      _
    // Predicated region
    $region18: #{tpu_custom_call.1} parent=1 // pred_check
      _
    $region19: #{tpu_custom_call.1} parent=1 // pred_check_branch
      %61 = sbr.rel (0) target = $region21
    $region20: #{tpu_custom_call.1} parent=1 // pred_region
      %s63 = ssub.s32 6144, 6144
      %64 = vsyncadd [#allocation11], %s63
      %s65 = sshll.u32 [#allocation10], 4
      %s66 = int_to_ptr.vmem [resolvable:$true] %s65
      %71 = dma.hbm_to_vmem [thread:$0]  %s4, 6144, %s66, [#allocation11], 128, 128, 8
    $region21: #{tpu_custom_call.1} parent=1 // pred_fallthru
      _
    // Predicated region
    $region22: #{tpu_custom_call.1} parent=1 // pred_check
      _
    $region23: #{tpu_custom_call.1} parent=1 // pred_check_branch
      %73 = sbr.rel (0) target = $region25
    $region24: #{tpu_custom_call.1} parent=1 // pred_region
      _
    $region25: #{tpu_custom_call.1} parent=1 // pred_fallthru
      _
    // Predicated region
    $region26: #{tpu_custom_call.1} parent=1 // pred_check
      _
    $region27: #{tpu_custom_call.1} parent=1 // pred_check_branch
      %75 = sbr.rel (0) target = $region29
    $region28: #{tpu_custom_call.1} parent=1 // pred_region
      %76 = dma.done [#allocation5], 16
    $region29: #{tpu_custom_call.1} parent=1 // pred_fallthru
      _
    // Predicated region
    $region30: #{tpu_custom_call.1} parent=1 // pred_check
      _
    $region31: #{tpu_custom_call.1} parent=1 // pred_check_branch
      %78 = sbr.rel (0) target = $region33
    $region32: #{tpu_custom_call.1} parent=1 // pred_region
      %79 = dma.done [#allocation3], 4096
    $region33: #{tpu_custom_call.1} parent=1 // pred_fallthru
      _
    // Predicated region
    $region34: #{tpu_custom_call.1} parent=1 // pred_check
      _
    $region35: #{tpu_custom_call.1} parent=1 // pred_check_branch
      %81 = sbr.rel (0) target = $region37
    $region36: #{tpu_custom_call.1} parent=1 // pred_region
      %82 = dma.done [#allocation8], 4096
    $region37: #{tpu_custom_call.1} parent=1 // pred_fallthru
      _
    // Predicated region
    $region38: #{tpu_custom_call.1} parent=1 // pred_check
      _
    $region39: #{tpu_custom_call.1} parent=1 // pred_check_branch
      %84 = sbr.rel (0) target = $region41
    $region40: #{tpu_custom_call.1} parent=1 // pred_region
      %85 = dma.done [#allocation8], 4096
    $region41: #{tpu_custom_call.1} parent=1 // pred_fallthru
      _
    // Predicated region
    $region42: #{tpu_custom_call.1} parent=1 // pred_check
      _
    $region43: #{tpu_custom_call.1} parent=1 // pred_check_branch
      %87 = sbr.rel (0) target = $region45
    $region44: #{tpu_custom_call.1} parent=1 // pred_region
      %88 = dma.done [#allocation11], 6144
    $region45: #{tpu_custom_call.1} parent=1 // pred_fallthru
      _
    %89 = sfence
    %v90 = vld [vmem:[#allocation6] sm:$0xff]
    %v91 = vld [vmem:[#allocation6 + $0x8] sm:$0xff]
    %v92 = vld [vmem:[#allocation6 + $0x10] sm:$0xff]
    %v93 = vld [vmem:[#allocation6 + $0x18] sm:$0xff]
    %v94 = vld [vmem:[#allocation6 + $0x20] sm:$0xff]
    %v95 = vld [vmem:[#allocation6 + $0x28] sm:$0xff]
    %v96 = vld [vmem:[#allocation6 + $0x30] sm:$0xff]
    %v97 = vld [vmem:[#allocation6 + $0x38] sm:$0xff]
    %v98 = vld [vmem:[#allocation6 + $0x40] sm:$0xff]
    %v99 = vld [vmem:[#allocation6 + $0x48] sm:$0xff]
    %v100 = vld [vmem:[#allocation6 + $0x50] sm:$0xff]
    %v101 = vld [vmem:[#allocation6 + $0x58] sm:$0xff]
    %v102 = vld [vmem:[#allocation6 + $0x60] sm:$0xff]
    %v103 = vld [vmem:[#allocation6 + $0x68] sm:$0xff]
    %v104 = vld [vmem:[#allocation6 + $0x70] sm:$0xff]
    %v105 = vld [vmem:[#allocation6 + $0x78] sm:$0xff]
    %v106 = vld [vmem:[#allocation6 + $0x80] sm:$0xff]
    %v107 = vld [vmem:[#allocation6 + $0x88] sm:$0xff]
    %v108 = vld [vmem:[#allocation6 + $0x90] sm:$0xff]
    %v109 = vld [vmem:[#allocation6 + $0x98] sm:$0xff]
    %v110 = vld [vmem:[#allocation6 + $0xa0] sm:$0xff]
    %v111 = vld [vmem:[#allocation6 + $0xa8] sm:$0xff]
    %v112 = vld [vmem:[#allocation6 + $0xb0] sm:$0xff]
    %v113 = vld [vmem:[#allocation6 + $0xb8] sm:$0xff]
    %v114 = vld [vmem:[#allocation6 + $0xc0] sm:$0xff]
    %v115 = vld [vmem:[#allocation6 + $0xc8] sm:$0xff]
    %v116 = vld [vmem:[#allocation6 + $0xd0] sm:$0xff]
    %v117 = vld [vmem:[#allocation6 + $0xd8] sm:$0xff]
    %v118 = vld [vmem:[#allocation6 + $0xe0] sm:$0xff]
    %v119 = vld [vmem:[#allocation6 + $0xe8] sm:$0xff]
    %v120 = vld [vmem:[#allocation6 + $0xf0] sm:$0xff]
    %v121 = vld [vmem:[#allocation6 + $0xf8] sm:$0xff]
    %v122 = vld [vmem:[#allocation7] sm:$0xff]
    %v123 = vld [vmem:[#allocation7 + $0x8] sm:$0xff]
    %v124 = vld [vmem:[#allocation7 + $0x10] sm:$0xff]
    %v125 = vld [vmem:[#allocation7 + $0x18] sm:$0xff]
    %v126 = vld [vmem:[#allocation7 + $0x20] sm:$0xff]
    %v127 = vld [vmem:[#allocation7 + $0x28] sm:$0xff]
    %v128 = vld [vmem:[#allocation7 + $0x30] sm:$0xff]
    %v129 = vld [vmem:[#allocation7 + $0x38] sm:$0xff]
    %v130 = vld [vmem:[#allocation7 + $0x40] sm:$0xff]
    %v131 = vld [vmem:[#allocation7 + $0x48] sm:$0xff]
    %v132 = vld [vmem:[#allocation7 + $0x50] sm:$0xff]
    %v133 = vld [vmem:[#allocation7 + $0x58] sm:$0xff]
    %v134 = vld [vmem:[#allocation7 + $0x60] sm:$0xff]
    %v135 = vld [vmem:[#allocation7 + $0x68] sm:$0xff]
    %v136 = vld [vmem:[#allocation7 + $0x70] sm:$0xff]
    %v137 = vld [vmem:[#allocation7 + $0x78] sm:$0xff]
    %v138 = vld [vmem:[#allocation7 + $0x80] sm:$0xff]
    %v139 = vld [vmem:[#allocation7 + $0x88] sm:$0xff]
    %v140 = vld [vmem:[#allocation7 + $0x90] sm:$0xff]
    %v141 = vld [vmem:[#allocation7 + $0x98] sm:$0xff]
    %v142 = vld [vmem:[#allocation7 + $0xa0] sm:$0xff]
    %v143 = vld [vmem:[#allocation7 + $0xa8] sm:$0xff]
    %v144 = vld [vmem:[#allocation7 + $0xb0] sm:$0xff]
    %v145 = vld [vmem:[#allocation7 + $0xb8] sm:$0xff]
    %v146 = vld [vmem:[#allocation7 + $0xc0] sm:$0xff]
    %v147 = vld [vmem:[#allocation7 + $0xc8] sm:$0xff]
    %v148 = vld [vmem:[#allocation7 + $0xd0] sm:$0xff]
    %v149 = vld [vmem:[#allocation7 + $0xd8] sm:$0xff]
    %v150 = vld [vmem:[#allocation7 + $0xe0] sm:$0xff]
    %v151 = vld [vmem:[#allocation7 + $0xe8] sm:$0xff]
    %v152 = vld [vmem:[#allocation7 + $0xf0] sm:$0xff]
    %v153 = vld [vmem:[#allocation7 + $0xf8] sm:$0xff]
    %v154 = vld [vmem:[#allocation9] sm:$0xff]
    %v155 = vld [vmem:[#allocation9 + $0x8] sm:$0xff]
    %v156 = vld [vmem:[#allocation9 + $0x10] sm:$0xff]
    %v157 = vld [vmem:[#allocation9 + $0x18] sm:$0xff]
    %v158 = vld [vmem:[#allocation9 + $0x20] sm:$0xff]
    %v159 = vld [vmem:[#allocation9 + $0x28] sm:$0xff]
    %v160 = vld [vmem:[#allocation9 + $0x30] sm:$0xff]
    %v161 = vld [vmem:[#allocation9 + $0x38] sm:$0xff]
    %v162 = vld [vmem:[#allocation9 + $0x40] sm:$0xff]
    %v163 = vld [vmem:[#allocation9 + $0x48] sm:$0xff]
    %v164 = vld [vmem:[#allocation9 + $0x50] sm:$0xff]
    %v165 = vld [vmem:[#allocation9 + $0x58] sm:$0xff]
    %v166 = vld [vmem:[#allocation9 + $0x60] sm:$0xff]
    %v167 = vld [vmem:[#allocation9 + $0x68] sm:$0xff]
    %v168 = vld [vmem:[#allocation9 + $0x70] sm:$0xff]
    %v169 = vld [vmem:[#allocation9 + $0x78] sm:$0xff]
    %v170 = vld [vmem:[#allocation9 + $0x80] sm:$0xff]
    %v171 = vld [vmem:[#allocation9 + $0x88] sm:$0xff]
    %v172 = vld [vmem:[#allocation9 + $0x90] sm:$0xff]
    %v173 = vld [vmem:[#allocation9 + $0x98] sm:$0xff]
    %v174 = vld [vmem:[#allocation9 + $0xa0] sm:$0xff]
    %v175 = vld [vmem:[#allocation9 + $0xa8] sm:$0xff]
    %v176 = vld [vmem:[#allocation9 + $0xb0] sm:$0xff]
    %v177 = vld [vmem:[#allocation9 + $0xb8] sm:$0xff]
    %v178 = vld [vmem:[#allocation9 + $0xc0] sm:$0xff]
    %v179 = vld [vmem:[#allocation9 + $0xc8] sm:$0xff]
    %v180 = vld [vmem:[#allocation9 + $0xd0] sm:$0xff]
    %v181 = vld [vmem:[#allocation9 + $0xd8] sm:$0xff]
    %v182 = vld [vmem:[#allocation9 + $0xe0] sm:$0xff]
    %v183 = vld [vmem:[#allocation9 + $0xe8] sm:$0xff]
    %v184 = vld [vmem:[#allocation9 + $0xf0] sm:$0xff]
    %v185 = vld [vmem:[#allocation9 + $0xf8] sm:$0xff]
    %v186 = vld [vmem:[#allocation10] sm:$0xff]
    %v187 = vld [vmem:[#allocation10 + $0x8] sm:$0xff]
    %v188 = vld [vmem:[#allocation10 + $0x10] sm:$0xff]
    %v189 = vld [vmem:[#allocation10 + $0x18] sm:$0xff]
    %v190 = vld [vmem:[#allocation10 + $0x20] sm:$0xff]
    %v191 = vld [vmem:[#allocation10 + $0x28] sm:$0xff]
    %v192 = vld [vmem:[#allocation10 + $0x30] sm:$0xff]
    %v193 = vld [vmem:[#allocation10 + $0x38] sm:$0xff]
    %v194 = vld [vmem:[#allocation10 + $0x40] sm:$0xff]
    %v195 = vld [vmem:[#allocation10 + $0x48] sm:$0xff]
    %v196 = vld [vmem:[#allocation10 + $0x50] sm:$0xff]
    %v197 = vld [vmem:[#allocation10 + $0x58] sm:$0xff]
    %v198 = vld [vmem:[#allocation10 + $0x60] sm:$0xff]
    %v199 = vld [vmem:[#allocation10 + $0x68] sm:$0xff]
    %v200 = vld [vmem:[#allocation10 + $0x70] sm:$0xff]
    %v201 = vld [vmem:[#allocation10 + $0x78] sm:$0xff]
    %v202 = vld [vmem:[#allocation10 + $0x80] sm:$0xff]
    %v203 = vld [vmem:[#allocation10 + $0x88] sm:$0xff]
    %v204 = vld [vmem:[#allocation10 + $0x90] sm:$0xff]
    %v205 = vld [vmem:[#allocation10 + $0x98] sm:$0xff]
    %v206 = vld [vmem:[#allocation10 + $0xa0] sm:$0xff]
    %v207 = vld [vmem:[#allocation10 + $0xa8] sm:$0xff]
    %v208 = vld [vmem:[#allocation10 + $0xb0] sm:$0xff]
    %v209 = vld [vmem:[#allocation10 + $0xb8] sm:$0xff]
    %v210 = vld [vmem:[#allocation10 + $0xc0] sm:$0xff]
    %v211 = vld [vmem:[#allocation10 + $0xc8] sm:$0xff]
    %v212 = vld [vmem:[#allocation10 + $0xd0] sm:$0xff]
    %v213 = vld [vmem:[#allocation10 + $0xd8] sm:$0xff]
    %v214 = vld [vmem:[#allocation10 + $0xe0] sm:$0xff]
    %v215 = vld [vmem:[#allocation10 + $0xe8] sm:$0xff]
    %v216 = vld [vmem:[#allocation10 + $0xf0] sm:$0xff]
    %v217 = vld [vmem:[#allocation10 + $0xf8] sm:$0xff]
    %218 = vmatprep.subr.mxu0 0.0
    %219 = vmatpush1.msra.mxu0 %v217
    %220 = vmatprep.subr.mxu0 0.0
    %221 = vmatpush1.msra.mxu0 %v216
    %222 = vmatprep.subr.mxu0 0.0
    %223 = vmatpush1.msra.mxu0 %v215
    %224 = vmatprep.subr.mxu0 0.0
    %225 = vmatpush1.msra.mxu0 %v214
    %226 = vmatprep.subr.mxu0 0.0
    %227 = vmatpush1.msra.mxu0 %v213
    %228 = vmatprep.subr.mxu0 0.0
    %229 = vmatpush1.msra.mxu0 %v212
    %230 = vmatprep.subr.mxu0 0.0
    %231 = vmatpush1.msra.mxu0 %v211
    %232 = vmatprep.subr.mxu0 0.0
    %233 = vmatpush1.msra.mxu0 %v210
    %234 = vmatprep.subr.mxu0 0.0
    %235 = vmatpush1.msra.mxu0 %v209
    %236 = vmatprep.subr.mxu0 0.0
    %237 = vmatpush1.msra.mxu0 %v208
    %238 = vmatprep.subr.mxu0 0.0
    %239 = vmatpush1.msra.mxu0 %v207
    %240 = vmatprep.subr.mxu0 0.0
    %241 = vmatpush1.msra.mxu0 %v206
    %242 = vmatprep.subr.mxu0 0.0
    %243 = vmatpush1.msra.mxu0 %v205
    %244 = vmatprep.subr.mxu0 0.0
    %245 = vmatpush1.msra.mxu0 %v204
    %246 = vmatprep.subr.mxu0 0.0
    %247 = vmatpush1.msra.mxu0 %v203
    %248 = vmatprep.subr.mxu0 0.0
    %249 = vmatpush1.msra.mxu0 %v202
    %250 = vmatprep.subr.mxu0 0.0
    %251 = vmatpush2.msra.mxu0 0.0
    %252 = vmatprep.subr.mxu0 0.0
    %253 = vmatpush2.msra.mxu0 0.0
    %254 = vmatprep.subr.mxu0 0.0
    %255 = vmatpush2.msra.mxu0 0.0
    %256 = vmatprep.subr.mxu0 0.0
    %257 = vmatpush2.msra.mxu0 0.0
    %258 = vmatprep.subr.mxu0 0.0
    %259 = vmatpush2.msra.mxu0 0.0
    %260 = vmatprep.subr.mxu0 0.0
    %261 = vmatpush2.msra.mxu0 0.0
    %262 = vmatprep.subr.mxu0 0.0
    %263 = vmatpush2.msra.mxu0 0.0
    %264 = vmatprep.subr.mxu0 0.0
    %265 = vmatpush2.msra.mxu0 0.0
    %266 = vmatprep.subr.mxu0 0.0
    %267 = vmatpush2.msra.mxu0 0.0
    %268 = vmatprep.subr.mxu0 0.0
    %269 = vmatpush2.msra.mxu0 0.0
    %270 = vmatprep.subr.mxu0 0.0
    %271 = vmatpush2.msra.mxu0 0.0
    %272 = vmatprep.subr.mxu0 0.0
    %273 = vmatpush2.msra.mxu0 0.0
    %274 = vmatprep.subr.mxu0 0.0
    %275 = vmatpush2.msra.mxu0 0.0
    %276 = vmatprep.subr.mxu0 0.0
    %277 = vmatpush2.msra.mxu0 0.0
    %278 = vmatprep.subr.mxu0 0.0
    %279 = vmatpush2.msra.mxu0 0.0
    %280 = vmatprep.subr.mxu0 0.0
    %281 = vmatpush2.msra.mxu0 0.0
    %282 = vmatprep.mubr.f32.mxu0 0.0
    %283 = vmatmul.mubr.f32.gmra.mxu0 %v122
    %v284 = vpop.f32.mrf.mxu0
    %v285 = vadd.f32 0.0, %v284
    %v286 = vpop.f32.mrf.mxu0
    %287 = vmatprep.mubr.f32.mxu0 0.0
    %288 = vmatmul.mubr.f32.gmra.mxu0 %v123
    %v289 = vpop.f32.mrf.mxu0
    %v290 = vadd.f32 0.0, %v289
    %v291 = vpop.f32.mrf.mxu0
    %292 = vmatprep.mubr.f32.mxu0 0.0
    %293 = vmatmul.mubr.f32.gmra.mxu0 %v124
    %v294 = vpop.f32.mrf.mxu0
    %v295 = vadd.f32 0.0, %v294
    %v296 = vpop.f32.mrf.mxu0
    %297 = vmatprep.mubr.f32.mxu0 0.0
    %298 = vmatmul.mubr.f32.gmra.mxu0 %v125
    %v299 = vpop.f32.mrf.mxu0
    %v300 = vadd.f32 0.0, %v299
    %v301 = vpop.f32.mrf.mxu0
    %302 = vmatprep.mubr.f32.mxu0 0.0
    %303 = vmatmul.mubr.f32.gmra.mxu0 %v126
    %v304 = vpop.f32.mrf.mxu0
    %v305 = vadd.f32 0.0, %v304
    %v306 = vpop.f32.mrf.mxu0
    %307 = vmatprep.mubr.f32.mxu0 0.0
    %308 = vmatmul.mubr.f32.gmra.mxu0 %v127
    %v309 = vpop.f32.mrf.mxu0
    %v310 = vadd.f32 0.0, %v309
    %v311 = vpop.f32.mrf.mxu0
    %312 = vmatprep.mubr.f32.mxu0 0.0
    %313 = vmatmul.mubr.f32.gmra.mxu0 %v128
    %v314 = vpop.f32.mrf.mxu0
    %v315 = vadd.f32 0.0, %v314
    %v316 = vpop.f32.mrf.mxu0
    %317 = vmatprep.mubr.f32.mxu0 0.0
    %318 = vmatmul.mubr.f32.gmra.mxu0 %v129
    %v319 = vpop.f32.mrf.mxu0
    %v320 = vadd.f32 0.0, %v319
    %v321 = vpop.f32.mrf.mxu0
    %322 = vmatprep.mubr.f32.mxu0 0.0
    %323 = vmatmul.mubr.f32.gmra.mxu0 %v130
    %v324 = vpop.f32.mrf.mxu0
    %v325 = vadd.f32 0.0, %v324
    %v326 = vpop.f32.mrf.mxu0
    %327 = vmatprep.mubr.f32.mxu0 0.0
    %328 = vmatmul.mubr.f32.gmra.mxu0 %v131
    %v329 = vpop.f32.mrf.mxu0
    %v330 = vadd.f32 0.0, %v329
    %v331 = vpop.f32.mrf.mxu0
    %332 = vmatprep.mubr.f32.mxu0 0.0
    %333 = vmatmul.mubr.f32.gmra.mxu0 %v132
    %v334 = vpop.f32.mrf.mxu0
    %v335 = vadd.f32 0.0, %v334
    %v336 = vpop.f32.mrf.mxu0
    %337 = vmatprep.mubr.f32.mxu0 0.0
    %338 = vmatmul.mubr.f32.gmra.mxu0 %v133
    %v339 = vpop.f32.mrf.mxu0
    %v340 = vadd.f32 0.0, %v339
    %v341 = vpop.f32.mrf.mxu0
    %342 = vmatprep.mubr.f32.mxu0 0.0
    %343 = vmatmul.mubr.f32.gmra.mxu0 %v134
    %v344 = vpop.f32.mrf.mxu0
    %v345 = vadd.f32 0.0, %v344
    %v346 = vpop.f32.mrf.mxu0
    %347 = vmatprep.mubr.f32.mxu0 0.0
    %348 = vmatmul.mubr.f32.gmra.mxu0 %v135
    %v349 = vpop.f32.mrf.mxu0
    %v350 = vadd.f32 0.0, %v349
    %v351 = vpop.f32.mrf.mxu0
    %352 = vmatprep.mubr.f32.mxu0 0.0
    %353 = vmatmul.mubr.f32.gmra.mxu0 %v136
    %v354 = vpop.f32.mrf.mxu0
    %v355 = vadd.f32 0.0, %v354
    %v356 = vpop.f32.mrf.mxu0
    %357 = vmatprep.mubr.f32.mxu0 0.0
    %358 = vmatmul.mubr.f32.gmra.mxu0 %v137
    %v359 = vpop.f32.mrf.mxu0
    %v360 = vadd.f32 0.0, %v359
    %v361 = vpop.f32.mrf.mxu0
    %362 = vmatprep.mubr.f32.mxu0 0.0
    %363 = vmatmul.mubr.f32.gmra.mxu0 %v138
    %v364 = vpop.f32.mrf.mxu0
    %v365 = vadd.f32 0.0, %v364
    %v366 = vpop.f32.mrf.mxu0
    %367 = vmatprep.mubr.f32.mxu0 0.0
    %368 = vmatmul.mubr.f32.gmra.mxu0 %v139
    %v369 = vpop.f32.mrf.mxu0
    %v370 = vadd.f32 0.0, %v369
    %v371 = vpop.f32.mrf.mxu0
    %372 = vmatprep.mubr.f32.mxu0 0.0
    %373 = vmatmul.mubr.f32.gmra.mxu0 %v140
    %v374 = vpop.f32.mrf.mxu0
    %v375 = vadd.f32 0.0, %v374
    %v376 = vpop.f32.mrf.mxu0
    %377 = vmatprep.mubr.f32.mxu0 0.0
    %378 = vmatmul.mubr.f32.gmra.mxu0 %v141
    %v379 = vpop.f32.mrf.mxu0
    %v380 = vadd.f32 0.0, %v379
    %v381 = vpop.f32.mrf.mxu0
    %382 = vmatprep.mubr.f32.mxu0 0.0
    %383 = vmatmul.mubr.f32.gmra.mxu0 %v142
    %v384 = vpop.f32.mrf.mxu0
    %v385 = vadd.f32 0.0, %v384
    %v386 = vpop.f32.mrf.mxu0
    %387 = vmatprep.mubr.f32.mxu0 0.0
    %388 = vmatmul.mubr.f32.gmra.mxu0 %v143
    %v389 = vpop.f32.mrf.mxu0
    %v390 = vadd.f32 0.0, %v389
    %v391 = vpop.f32.mrf.mxu0
    %392 = vmatprep.mubr.f32.mxu0 0.0
    %393 = vmatmul.mubr.f32.gmra.mxu0 %v144
    %v394 = vpop.f32.mrf.mxu0
    %v395 = vadd.f32 0.0, %v394
    %v396 = vpop.f32.mrf.mxu0
    %397 = vmatprep.mubr.f32.mxu0 0.0
    %398 = vmatmul.mubr.f32.gmra.mxu0 %v145
    %v399 = vpop.f32.mrf.mxu0
    %v400 = vadd.f32 0.0, %v399
    %v401 = vpop.f32.mrf.mxu0
    %402 = vmatprep.mubr.f32.mxu0 0.0
    %403 = vmatmul.mubr.f32.gmra.mxu0 %v146
    %v404 = vpop.f32.mrf.mxu0
    %v405 = vadd.f32 0.0, %v404
    %v406 = vpop.f32.mrf.mxu0
    %407 = vmatprep.mubr.f32.mxu0 0.0
    %408 = vmatmul.mubr.f32.gmra.mxu0 %v147
    %v409 = vpop.f32.mrf.mxu0
    %v410 = vadd.f32 0.0, %v409
    %v411 = vpop.f32.mrf.mxu0
    %412 = vmatprep.mubr.f32.mxu0 0.0
    %413 = vmatmul.mubr.f32.gmra.mxu0 %v148
    %v414 = vpop.f32.mrf.mxu0
    %v415 = vadd.f32 0.0, %v414
    %v416 = vpop.f32.mrf.mxu0
    %417 = vmatprep.mubr.f32.mxu0 0.0
    %418 = vmatmul.mubr.f32.gmra.mxu0 %v149
    %v419 = vpop.f32.mrf.mxu0
    %v420 = vadd.f32 0.0, %v419
    %v421 = vpop.f32.mrf.mxu0
    %422 = vmatprep.mubr.f32.mxu0 0.0
    %423 = vmatmul.mubr.f32.gmra.mxu0 %v150
    %v424 = vpop.f32.mrf.mxu0
    %v425 = vadd.f32 0.0, %v424
    %v426 = vpop.f32.mrf.mxu0
    %427 = vmatprep.mubr.f32.mxu0 0.0
    %428 = vmatmul.mubr.f32.gmra.mxu0 %v151
    %v429 = vpop.f32.mrf.mxu0
    %v430 = vadd.f32 0.0, %v429
    %v431 = vpop.f32.mrf.mxu0
    %432 = vmatprep.mubr.f32.mxu0 0.0
    %433 = vmatmul.mubr.f32.gmra.mxu0 %v152
    %v434 = vpop.f32.mrf.mxu0
    %v435 = vadd.f32 0.0, %v434
    %v436 = vpop.f32.mrf.mxu0
    %437 = vmatprep.mubr.f32.mxu0 0.0
    %438 = vmatmul.mubr.f32.gmra.mxu0 %v153
    %v439 = vpop.f32.mrf.mxu0
    %v440 = vadd.f32 0.0, %v439
    %v441 = vpop.f32.mrf.mxu0
    %442 = vdwg.mxu0
    %443 = vmatprep.subr.mxu0 0.0
    %444 = vmatpush1.msra.mxu0 %v201
    %445 = vmatprep.subr.mxu0 0.0
    %446 = vmatpush1.msra.mxu0 %v200
    %447 = vmatprep.subr.mxu0 0.0
    %448 = vmatpush1.msra.mxu0 %v199
    %449 = vmatprep.subr.mxu0 0.0
    %450 = vmatpush1.msra.mxu0 %v198
    %451 = vmatprep.subr.mxu0 0.0
    %452 = vmatpush1.msra.mxu0 %v197
    %453 = vmatprep.subr.mxu0 0.0
    %454 = vmatpush1.msra.mxu0 %v196
    %455 = vmatprep.subr.mxu0 0.0
    %456 = vmatpush1.msra.mxu0 %v195
    %457 = vmatprep.subr.mxu0 0.0
    %458 = vmatpush1.msra.mxu0 %v194
    %459 = vmatprep.subr.mxu0 0.0
    %460 = vmatpush1.msra.mxu0 %v193
    %461 = vmatprep.subr.mxu0 0.0
    %462 = vmatpush1.msra.mxu0 %v192
    %463 = vmatprep.subr.mxu0 0.0
    %464 = vmatpush1.msra.mxu0 %v191
    %465 = vmatprep.subr.mxu0 0.0
    %466 = vmatpush1.msra.mxu0 %v190
    %467 = vmatprep.subr.mxu0 0.0
    %468 = vmatpush1.msra.mxu0 %v189
    %469 = vmatprep.subr.mxu0 0.0
    %470 = vmatpush1.msra.mxu0 %v188
    %471 = vmatprep.subr.mxu0 0.0
    %472 = vmatpush1.msra.mxu0 %v187
    %473 = vmatprep.subr.mxu0 0.0
    %474 = vmatpush1.msra.mxu0 %v186
    %475 = vmatprep.subr.mxu0 0.0
    %476 = vmatpush2.msra.mxu0 0.0
    %477 = vmatprep.subr.mxu0 0.0
    %478 = vmatpush2.msra.mxu0 0.0
    %479 = vmatprep.subr.mxu0 0.0
    %480 = vmatpush2.msra.mxu0 0.0
    %481 = vmatprep.subr.mxu0 0.0
    %482 = vmatpush2.msra.mxu0 0.0
    %483 = vmatprep.subr.mxu0 0.0
    %484 = vmatpush2.msra.mxu0 0.0
    %485 = vmatprep.subr.mxu0 0.0
    %486 = vmatpush2.msra.mxu0 0.0
    %487 = vmatprep.subr.mxu0 0.0
    %488 = vmatpush2.msra.mxu0 0.0
    %489 = vmatprep.subr.mxu0 0.0
    %490 = vmatpush2.msra.mxu0 0.0
    %491 = vmatprep.subr.mxu0 0.0
    %492 = vmatpush2.msra.mxu0 0.0
    %493 = vmatprep.subr.mxu0 0.0
    %494 = vmatpush2.msra.mxu0 0.0
    %495 = vmatprep.subr.mxu0 0.0
    %496 = vmatpush2.msra.mxu0 0.0
    %497 = vmatprep.subr.mxu0 0.0
    %498 = vmatpush2.msra.mxu0 0.0
    %499 = vmatprep.subr.mxu0 0.0
    %500 = vmatpush2.msra.mxu0 0.0
    %501 = vmatprep.subr.mxu0 0.0
    %502 = vmatpush2.msra.mxu0 0.0
    %503 = vmatprep.subr.mxu0 0.0
    %504 = vmatpush2.msra.mxu0 0.0
    %505 = vmatprep.subr.mxu0 0.0
    %506 = vmatpush2.msra.mxu0 0.0
    %507 = vmatprep.mubr.f32.mxu0 0.0
    %508 = vmatmul.mubr.f32.gmra.mxu0 %v90
    %v509 = vpop.f32.mrf.mxu0
    %v510 = vadd.f32 %v285, %v509
    %v511 = vpop.f32.mrf.mxu0
    %512 = vmatprep.mubr.f32.mxu0 0.0
    %513 = vmatmul.mubr.f32.gmra.mxu0 %v91
    %v514 = vpop.f32.mrf.mxu0
    %v515 = vadd.f32 %v290, %v514
    %v516 = vpop.f32.mrf.mxu0
    %517 = vmatprep.mubr.f32.mxu0 0.0
    %518 = vmatmul.mubr.f32.gmra.mxu0 %v92
    %v519 = vpop.f32.mrf.mxu0
    %v520 = vadd.f32 %v295, %v519
    %v521 = vpop.f32.mrf.mxu0
    %522 = vmatprep.mubr.f32.mxu0 0.0
    %523 = vmatmul.mubr.f32.gmra.mxu0 %v93
    %v524 = vpop.f32.mrf.mxu0
    %v525 = vadd.f32 %v300, %v524
    %v526 = vpop.f32.mrf.mxu0
    %527 = vmatprep.mubr.f32.mxu0 0.0
    %528 = vmatmul.mubr.f32.gmra.mxu0 %v94
    %v529 = vpop.f32.mrf.mxu0
    %v530 = vadd.f32 %v305, %v529
    %v531 = vpop.f32.mrf.mxu0
    %532 = vmatprep.mubr.f32.mxu0 0.0
    %533 = vmatmul.mubr.f32.gmra.mxu0 %v95
    %v534 = vpop.f32.mrf.mxu0
    %v535 = vadd.f32 %v310, %v534
    %v536 = vpop.f32.mrf.mxu0
    %537 = vmatprep.mubr.f32.mxu0 0.0
    %538 = vmatmul.mubr.f32.gmra.mxu0 %v96
    %v539 = vpop.f32.mrf.mxu0
    %v540 = vadd.f32 %v315, %v539
    %v541 = vpop.f32.mrf.mxu0
    %542 = vmatprep.mubr.f32.mxu0 0.0
    %543 = vmatmul.mubr.f32.gmra.mxu0 %v97
    %v544 = vpop.f32.mrf.mxu0
    %v545 = vadd.f32 %v320, %v544
    %v546 = vpop.f32.mrf.mxu0
    %547 = vmatprep.mubr.f32.mxu0 0.0
    %548 = vmatmul.mubr.f32.gmra.mxu0 %v98
    %v549 = vpop.f32.mrf.mxu0
    %v550 = vadd.f32 %v325, %v549
    %v551 = vpop.f32.mrf.mxu0
    %552 = vmatprep.mubr.f32.mxu0 0.0
    %553 = vmatmul.mubr.f32.gmra.mxu0 %v99
    %v554 = vpop.f32.mrf.mxu0
    %v555 = vadd.f32 %v330, %v554
    %v556 = vpop.f32.mrf.mxu0
    %557 = vmatprep.mubr.f32.mxu0 0.0
    %558 = vmatmul.mubr.f32.gmra.mxu0 %v100
    %v559 = vpop.f32.mrf.mxu0
    %v560 = vadd.f32 %v335, %v559
    %v561 = vpop.f32.mrf.mxu0
    %562 = vmatprep.mubr.f32.mxu0 0.0
    %563 = vmatmul.mubr.f32.gmra.mxu0 %v101
    %v564 = vpop.f32.mrf.mxu0
    %v565 = vadd.f32 %v340, %v564
    %v566 = vpop.f32.mrf.mxu0
    %567 = vmatprep.mubr.f32.mxu0 0.0
    %568 = vmatmul.mubr.f32.gmra.mxu0 %v102
    %v569 = vpop.f32.mrf.mxu0
    %v570 = vadd.f32 %v345, %v569
    %v571 = vpop.f32.mrf.mxu0
    %572 = vmatprep.mubr.f32.mxu0 0.0
    %573 = vmatmul.mubr.f32.gmra.mxu0 %v103
    %v574 = vpop.f32.mrf.mxu0
    %v575 = vadd.f32 %v350, %v574
    %v576 = vpop.f32.mrf.mxu0
    %577 = vmatprep.mubr.f32.mxu0 0.0
    %578 = vmatmul.mubr.f32.gmra.mxu0 %v104
    %v579 = vpop.f32.mrf.mxu0
    %v580 = vadd.f32 %v355, %v579
    %v581 = vpop.f32.mrf.mxu0
    %582 = vmatprep.mubr.f32.mxu0 0.0
    %583 = vmatmul.mubr.f32.gmra.mxu0 %v105
    %v584 = vpop.f32.mrf.mxu0
    %v585 = vadd.f32 %v360, %v584
    %v586 = vpop.f32.mrf.mxu0
    %587 = vmatprep.mubr.f32.mxu0 0.0
    %588 = vmatmul.mubr.f32.gmra.mxu0 %v106
    %v589 = vpop.f32.mrf.mxu0
    %v590 = vadd.f32 %v365, %v589
    %v591 = vpop.f32.mrf.mxu0
    %592 = vmatprep.mubr.f32.mxu0 0.0
    %593 = vmatmul.mubr.f32.gmra.mxu0 %v107
    %v594 = vpop.f32.mrf.mxu0
    %v595 = vadd.f32 %v370, %v594
    %v596 = vpop.f32.mrf.mxu0
    %597 = vmatprep.mubr.f32.mxu0 0.0
    %598 = vmatmul.mubr.f32.gmra.mxu0 %v108
    %v599 = vpop.f32.mrf.mxu0
    %v600 = vadd.f32 %v375, %v599
    %v601 = vpop.f32.mrf.mxu0
    %602 = vmatprep.mubr.f32.mxu0 0.0
    %603 = vmatmul.mubr.f32.gmra.mxu0 %v109
    %v604 = vpop.f32.mrf.mxu0
    %v605 = vadd.f32 %v380, %v604
    %v606 = vpop.f32.mrf.mxu0
    %607 = vmatprep.mubr.f32.mxu0 0.0
    %608 = vmatmul.mubr.f32.gmra.mxu0 %v110
    %v609 = vpop.f32.mrf.mxu0
    %v610 = vadd.f32 %v385, %v609
    %v611 = vpop.f32.mrf.mxu0
    %612 = vmatprep.mubr.f32.mxu0 0.0
    %613 = vmatmul.mubr.f32.gmra.mxu0 %v111
    %v614 = vpop.f32.mrf.mxu0
    %v615 = vadd.f32 %v390, %v614
    %v616 = vpop.f32.mrf.mxu0
    %617 = vmatprep.mubr.f32.mxu0 0.0
    %618 = vmatmul.mubr.f32.gmra.mxu0 %v112
    %v619 = vpop.f32.mrf.mxu0
    %v620 = vadd.f32 %v395, %v619
    %v621 = vpop.f32.mrf.mxu0
    %622 = vmatprep.mubr.f32.mxu0 0.0
    %623 = vmatmul.mubr.f32.gmra.mxu0 %v113
    %v624 = vpop.f32.mrf.mxu0
    %v625 = vadd.f32 %v400, %v624
    %v626 = vpop.f32.mrf.mxu0
    %627 = vmatprep.mubr.f32.mxu0 0.0
    %628 = vmatmul.mubr.f32.gmra.mxu0 %v114
    %v629 = vpop.f32.mrf.mxu0
    %v630 = vadd.f32 %v405, %v629
    %v631 = vpop.f32.mrf.mxu0
    %632 = vmatprep.mubr.f32.mxu0 0.0
    %633 = vmatmul.mubr.f32.gmra.mxu0 %v115
    %v634 = vpop.f32.mrf.mxu0
    %v635 = vadd.f32 %v410, %v634
    %v636 = vpop.f32.mrf.mxu0
    %637 = vmatprep.mubr.f32.mxu0 0.0
    %638 = vmatmul.mubr.f32.gmra.mxu0 %v116
    %v639 = vpop.f32.mrf.mxu0
    %v640 = vadd.f32 %v415, %v639
    %v641 = vpop.f32.mrf.mxu0
    %642 = vmatprep.mubr.f32.mxu0 0.0
    %643 = vmatmul.mubr.f32.gmra.mxu0 %v117
    %v644 = vpop.f32.mrf.mxu0
    %v645 = vadd.f32 %v420, %v644
    %v646 = vpop.f32.mrf.mxu0
    %647 = vmatprep.mubr.f32.mxu0 0.0
    %648 = vmatmul.mubr.f32.gmra.mxu0 %v118
    %v649 = vpop.f32.mrf.mxu0
    %v650 = vadd.f32 %v425, %v649
    %v651 = vpop.f32.mrf.mxu0
    %652 = vmatprep.mubr.f32.mxu0 0.0
    %653 = vmatmul.mubr.f32.gmra.mxu0 %v119
    %v654 = vpop.f32.mrf.mxu0
    %v655 = vadd.f32 %v430, %v654
    %v656 = vpop.f32.mrf.mxu0
    %657 = vmatprep.mubr.f32.mxu0 0.0
    %658 = vmatmul.mubr.f32.gmra.mxu0 %v120
    %v659 = vpop.f32.mrf.mxu0
    %v660 = vadd.f32 %v435, %v659
    %v661 = vpop.f32.mrf.mxu0
    %662 = vmatprep.mubr.f32.mxu0 0.0
    %663 = vmatmul.mubr.f32.gmra.mxu0 %v121
    %v664 = vpop.f32.mrf.mxu0
    %v665 = vadd.f32 %v440, %v664
    %v666 = vpop.f32.mrf.mxu0
    %667 = vdwg.mxu0
    %v668 = vld [vmem:[#allocation10 + $0x100] sm:$0xff]
    %v669 = vld [vmem:[#allocation10 + $0x108] sm:$0xff]
    %v670 = vld [vmem:[#allocation10 + $0x110] sm:$0xff]
    %v671 = vld [vmem:[#allocation10 + $0x118] sm:$0xff]
    %v672 = vld [vmem:[#allocation10 + $0x120] sm:$0xff]
    %v673 = vld [vmem:[#allocation10 + $0x128] sm:$0xff]
    %v674 = vld [vmem:[#allocation10 + $0x130] sm:$0xff]
    %v675 = vld [vmem:[#allocation10 + $0x138] sm:$0xff]
    %v676 = vld [vmem:[#allocation10 + $0x140] sm:$0xff]
    %v677 = vld [vmem:[#allocation10 + $0x148] sm:$0xff]
    %v678 = vld [vmem:[#allocation10 + $0x150] sm:$0xff]
    %v679 = vld [vmem:[#allocation10 + $0x158] sm:$0xff]
    %v680 = vld [vmem:[#allocation10 + $0x160] sm:$0xff]
    %v681 = vld [vmem:[#allocation10 + $0x168] sm:$0xff]
    %v682 = vld [vmem:[#allocation10 + $0x170] sm:$0xff]
    %v683 = vld [vmem:[#allocation10 + $0x178] sm:$0xff]
    %684 = vmatprep.subr.mxu0 0.0
    %685 = vmatpush1.msra.mxu0 %v683
    %686 = vmatprep.subr.mxu0 0.0
    %687 = vmatpush1.msra.mxu0 %v682
    %688 = vmatprep.subr.mxu0 0.0
    %689 = vmatpush1.msra.mxu0 %v681
    %690 = vmatprep.subr.mxu0 0.0
    %691 = vmatpush1.msra.mxu0 %v680
    %692 = vmatprep.subr.mxu0 0.0
    %693 = vmatpush1.msra.mxu0 %v679
    %694 = vmatprep.subr.mxu0 0.0
    %695 = vmatpush1.msra.mxu0 %v678
    %696 = vmatprep.subr.mxu0 0.0
    %697 = vmatpush1.msra.mxu0 %v677
    %698 = vmatprep.subr.mxu0 0.0
    %699 = vmatpush1.msra.mxu0 %v676
    %700 = vmatprep.subr.mxu0 0.0
    %701 = vmatpush1.msra.mxu0 %v675
    %702 = vmatprep.subr.mxu0 0.0
    %703 = vmatpush1.msra.mxu0 %v674
    %704 = vmatprep.subr.mxu0 0.0
    %705 = vmatpush1.msra.mxu0 %v673
    %706 = vmatprep.subr.mxu0 0.0
    %707 = vmatpush1.msra.mxu0 %v672
    %708 = vmatprep.subr.mxu0 0.0
    %709 = vmatpush1.msra.mxu0 %v671
    %710 = vmatprep.subr.mxu0 0.0
    %711 = vmatpush1.msra.mxu0 %v670
    %712 = vmatprep.subr.mxu0 0.0
    %713 = vmatpush1.msra.mxu0 %v669
    %714 = vmatprep.subr.mxu0 0.0
    %715 = vmatpush1.msra.mxu0 %v668
    %716 = vmatprep.subr.mxu0 0.0
    %717 = vmatpush2.msra.mxu0 0.0
    %718 = vmatprep.subr.mxu0 0.0
    %719 = vmatpush2.msra.mxu0 0.0
    %720 = vmatprep.subr.mxu0 0.0
    %721 = vmatpush2.msra.mxu0 0.0
    %722 = vmatprep.subr.mxu0 0.0
    %723 = vmatpush2.msra.mxu0 0.0
    %724 = vmatprep.subr.mxu0 0.0
    %725 = vmatpush2.msra.mxu0 0.0
    %726 = vmatprep.subr.mxu0 0.0
    %727 = vmatpush2.msra.mxu0 0.0
    %728 = vmatprep.subr.mxu0 0.0
    %729 = vmatpush2.msra.mxu0 0.0
    %730 = vmatprep.subr.mxu0 0.0
    %731 = vmatpush2.msra.mxu0 0.0
    %732 = vmatprep.subr.mxu0 0.0
    %733 = vmatpush2.msra.mxu0 0.0
    %734 = vmatprep.subr.mxu0 0.0
    %735 = vmatpush2.msra.mxu0 0.0
    %736 = vmatprep.subr.mxu0 0.0
    %737 = vmatpush2.msra.mxu0 0.0
    %738 = vmatprep.subr.mxu0 0.0
    %739 = vmatpush2.msra.mxu0 0.0
    %740 = vmatprep.subr.mxu0 0.0
    %741 = vmatpush2.msra.mxu0 0.0
    %742 = vmatprep.subr.mxu0 0.0
    %743 = vmatpush2.msra.mxu0 0.0
    %744 = vmatprep.subr.mxu0 0.0
    %745 = vmatpush2.msra.mxu0 0.0
    %746 = vmatprep.subr.mxu0 0.0
    %747 = vmatpush2.msra.mxu0 0.0
    %748 = vmatprep.mubr.f32.mxu0 0.0
    %749 = vmatmul.mubr.f32.gmra.mxu0 %v154
    %v750 = vpop.f32.mrf.mxu0
    %v751 = vadd.f32 0.0, %v750
    %v752 = vpop.f32.mrf.mxu0
    %753 = vmatprep.mubr.f32.mxu0 0.0
    %754 = vmatmul.mubr.f32.gmra.mxu0 %v155
    %v755 = vpop.f32.mrf.mxu0
    %v756 = vadd.f32 0.0, %v755
    %v757 = vpop.f32.mrf.mxu0
    %758 = vmatprep.mubr.f32.mxu0 0.0
    %759 = vmatmul.mubr.f32.gmra.mxu0 %v156
    %v760 = vpop.f32.mrf.mxu0
    %v761 = vadd.f32 0.0, %v760
    %v762 = vpop.f32.mrf.mxu0
    %763 = vmatprep.mubr.f32.mxu0 0.0
    %764 = vmatmul.mubr.f32.gmra.mxu0 %v157
    %v765 = vpop.f32.mrf.mxu0
    %v766 = vadd.f32 0.0, %v765
    %v767 = vpop.f32.mrf.mxu0
    %768 = vmatprep.mubr.f32.mxu0 0.0
    %769 = vmatmul.mubr.f32.gmra.mxu0 %v158
    %v770 = vpop.f32.mrf.mxu0
    %v771 = vadd.f32 0.0, %v770
    %v772 = vpop.f32.mrf.mxu0
    %773 = vmatprep.mubr.f32.mxu0 0.0
    %774 = vmatmul.mubr.f32.gmra.mxu0 %v159
    %v775 = vpop.f32.mrf.mxu0
    %v776 = vadd.f32 0.0, %v775
    %v777 = vpop.f32.mrf.mxu0
    %778 = vmatprep.mubr.f32.mxu0 0.0
    %779 = vmatmul.mubr.f32.gmra.mxu0 %v160
    %v780 = vpop.f32.mrf.mxu0
    %v781 = vadd.f32 0.0, %v780
    %v782 = vpop.f32.mrf.mxu0
    %783 = vmatprep.mubr.f32.mxu0 0.0
    %784 = vmatmul.mubr.f32.gmra.mxu0 %v161
    %v785 = vpop.f32.mrf.mxu0
    %v786 = vadd.f32 0.0, %v785
    %v787 = vpop.f32.mrf.mxu0
    %788 = vmatprep.mubr.f32.mxu0 0.0
    %789 = vmatmul.mubr.f32.gmra.mxu0 %v162
    %v790 = vpop.f32.mrf.mxu0
    %v791 = vadd.f32 0.0, %v790
    %v792 = vpop.f32.mrf.mxu0
    %793 = vmatprep.mubr.f32.mxu0 0.0
    %794 = vmatmul.mubr.f32.gmra.mxu0 %v163
    %v795 = vpop.f32.mrf.mxu0
    %v796 = vadd.f32 0.0, %v795
    %v797 = vpop.f32.mrf.mxu0
    %798 = vmatprep.mubr.f32.mxu0 0.0
    %799 = vmatmul.mubr.f32.gmra.mxu0 %v164
    %v800 = vpop.f32.mrf.mxu0
    %v801 = vadd.f32 0.0, %v800
    %v802 = vpop.f32.mrf.mxu0
    %803 = vmatprep.mubr.f32.mxu0 0.0
    %804 = vmatmul.mubr.f32.gmra.mxu0 %v165
    %v805 = vpop.f32.mrf.mxu0
    %v806 = vadd.f32 0.0, %v805
    %v807 = vpop.f32.mrf.mxu0
    %808 = vmatprep.mubr.f32.mxu0 0.0
    %809 = vmatmul.mubr.f32.gmra.mxu0 %v166
    %v810 = vpop.f32.mrf.mxu0
    %v811 = vadd.f32 0.0, %v810
    %v812 = vpop.f32.mrf.mxu0
    %813 = vmatprep.mubr.f32.mxu0 0.0
    %814 = vmatmul.mubr.f32.gmra.mxu0 %v167
    %v815 = vpop.f32.mrf.mxu0
    %v816 = vadd.f32 0.0, %v815
    %v817 = vpop.f32.mrf.mxu0
    %818 = vmatprep.mubr.f32.mxu0 0.0
    %819 = vmatmul.mubr.f32.gmra.mxu0 %v168
    %v820 = vpop.f32.mrf.mxu0
    %v821 = vadd.f32 0.0, %v820
    %v822 = vpop.f32.mrf.mxu0
    %823 = vmatprep.mubr.f32.mxu0 0.0
    %824 = vmatmul.mubr.f32.gmra.mxu0 %v169
    %v825 = vpop.f32.mrf.mxu0
    %v826 = vadd.f32 0.0, %v825
    %v827 = vpop.f32.mrf.mxu0
    %828 = vmatprep.mubr.f32.mxu0 0.0
    %829 = vmatmul.mubr.f32.gmra.mxu0 %v170
    %v830 = vpop.f32.mrf.mxu0
    %v831 = vadd.f32 0.0, %v830
    %v832 = vpop.f32.mrf.mxu0
    %833 = vmatprep.mubr.f32.mxu0 0.0
    %834 = vmatmul.mubr.f32.gmra.mxu0 %v171
    %v835 = vpop.f32.mrf.mxu0
    %v836 = vadd.f32 0.0, %v835
    %v837 = vpop.f32.mrf.mxu0
    %838 = vmatprep.mubr.f32.mxu0 0.0
    %839 = vmatmul.mubr.f32.gmra.mxu0 %v172
    %v840 = vpop.f32.mrf.mxu0
    %v841 = vadd.f32 0.0, %v840
    %v842 = vpop.f32.mrf.mxu0
    %843 = vmatprep.mubr.f32.mxu0 0.0
    %844 = vmatmul.mubr.f32.gmra.mxu0 %v173
    %v845 = vpop.f32.mrf.mxu0
    %v846 = vadd.f32 0.0, %v845
    %v847 = vpop.f32.mrf.mxu0
    %848 = vmatprep.mubr.f32.mxu0 0.0
    %849 = vmatmul.mubr.f32.gmra.mxu0 %v174
    %v850 = vpop.f32.mrf.mxu0
    %v851 = vadd.f32 0.0, %v850
    %v852 = vpop.f32.mrf.mxu0
    %853 = vmatprep.mubr.f32.mxu0 0.0
    %854 = vmatmul.mubr.f32.gmra.mxu0 %v175
    %v855 = vpop.f32.mrf.mxu0
    %v856 = vadd.f32 0.0, %v855
    %v857 = vpop.f32.mrf.mxu0
    %858 = vmatprep.mubr.f32.mxu0 0.0
    %859 = vmatmul.mubr.f32.gmra.mxu0 %v176
    %v860 = vpop.f32.mrf.mxu0
    %v861 = vadd.f32 0.0, %v860
    %v862 = vpop.f32.mrf.mxu0
    %863 = vmatprep.mubr.f32.mxu0 0.0
    %864 = vmatmul.mubr.f32.gmra.mxu0 %v177
    %v865 = vpop.f32.mrf.mxu0
    %v866 = vadd.f32 0.0, %v865
    %v867 = vpop.f32.mrf.mxu0
    %868 = vmatprep.mubr.f32.mxu0 0.0
    %869 = vmatmul.mubr.f32.gmra.mxu0 %v178
    %v870 = vpop.f32.mrf.mxu0
    %v871 = vadd.f32 0.0, %v870
    %v872 = vpop.f32.mrf.mxu0
    %873 = vmatprep.mubr.f32.mxu0 0.0
    %874 = vmatmul.mubr.f32.gmra.mxu0 %v179
    %v875 = vpop.f32.mrf.mxu0
    %v876 = vadd.f32 0.0, %v875
    %v877 = vpop.f32.mrf.mxu0
    %878 = vmatprep.mubr.f32.mxu0 0.0
    %879 = vmatmul.mubr.f32.gmra.mxu0 %v180
    %v880 = vpop.f32.mrf.mxu0
    %v881 = vadd.f32 0.0, %v880
    %v882 = vpop.f32.mrf.mxu0
    %883 = vmatprep.mubr.f32.mxu0 0.0
    %884 = vmatmul.mubr.f32.gmra.mxu0 %v181
    %v885 = vpop.f32.mrf.mxu0
    %v886 = vadd.f32 0.0, %v885
    %v887 = vpop.f32.mrf.mxu0
    %888 = vmatprep.mubr.f32.mxu0 0.0
    %889 = vmatmul.mubr.f32.gmra.mxu0 %v182
    %v890 = vpop.f32.mrf.mxu0
    %v891 = vadd.f32 0.0, %v890
    %v892 = vpop.f32.mrf.mxu0
    %893 = vmatprep.mubr.f32.mxu0 0.0
    %894 = vmatmul.mubr.f32.gmra.mxu0 %v183
    %v895 = vpop.f32.mrf.mxu0
    %v896 = vadd.f32 0.0, %v895
    %v897 = vpop.f32.mrf.mxu0
    %898 = vmatprep.mubr.f32.mxu0 0.0
    %899 = vmatmul.mubr.f32.gmra.mxu0 %v184
    %v900 = vpop.f32.mrf.mxu0
    %v901 = vadd.f32 0.0, %v900
    %v902 = vpop.f32.mrf.mxu0
    %903 = vmatprep.mubr.f32.mxu0 0.0
    %904 = vmatmul.mubr.f32.gmra.mxu0 %v185
    %v905 = vpop.f32.mrf.mxu0
    %v906 = vadd.f32 0.0, %v905
    %v907 = vpop.f32.mrf.mxu0
    %908 = vdwg.mxu0
    %v909 = vadd.f32 %v510, %v751
    %v910 = vadd.f32 %v515, %v756
    %v911 = vadd.f32 %v520, %v761
    %v912 = vadd.f32 %v525, %v766
    %v913 = vadd.f32 %v530, %v771
    %v914 = vadd.f32 %v535, %v776
    %v915 = vadd.f32 %v540, %v781
    %v916 = vadd.f32 %v545, %v786
    %v917 = vadd.f32 %v550, %v791
    %v918 = vadd.f32 %v555, %v796
    %v919 = vadd.f32 %v560, %v801
    %v920 = vadd.f32 %v565, %v806
    %v921 = vadd.f32 %v570, %v811
    %v922 = vadd.f32 %v575, %v816
    %v923 = vadd.f32 %v580, %v821
    %v924 = vadd.f32 %v585, %v826
    %v925 = vadd.f32 %v590, %v831
    %v926 = vadd.f32 %v595, %v836
    %v927 = vadd.f32 %v600, %v841
    %v928 = vadd.f32 %v605, %v846
    %v929 = vadd.f32 %v610, %v851
    %v930 = vadd.f32 %v615, %v856
    %v931 = vadd.f32 %v620, %v861
    %v932 = vadd.f32 %v625, %v866
    %v933 = vadd.f32 %v630, %v871
    %v934 = vadd.f32 %v635, %v876
    %v935 = vadd.f32 %v640, %v881
    %v936 = vadd.f32 %v645, %v886
    %v937 = vadd.f32 %v650, %v891
    %v938 = vadd.f32 %v655, %v896
    %v939 = vadd.f32 %v660, %v901
    %v940 = vadd.f32 %v665, %v906
    %v941 = vld [vmem:[%s5] sm:$0x1]
    %v943 = vlaneseq
    %v944 = vshrl.u32 %v943, 7
    %v945 = vsub.s32 0, %v944
    %v946 = vrot.slane %v941, %v945
    %v948 = vadd.f32 %v909, %v946
    %v949 = vadd.f32 %v910, %v946
    %v950 = vadd.f32 %v911, %v946
    %v951 = vadd.f32 %v912, %v946
    %v952 = vadd.f32 %v913, %v946
    %v953 = vadd.f32 %v914, %v946
    %v954 = vadd.f32 %v915, %v946
    %v955 = vadd.f32 %v916, %v946
    %v956 = vadd.f32 %v917, %v946
    %v957 = vadd.f32 %v918, %v946
    %v958 = vadd.f32 %v919, %v946
    %v959 = vadd.f32 %v920, %v946
    %v960 = vadd.f32 %v921, %v946
    %v961 = vadd.f32 %v922, %v946
    %v962 = vadd.f32 %v923, %v946
    %v963 = vadd.f32 %v924, %v946
    %v964 = vadd.f32 %v925, %v946
    %v965 = vadd.f32 %v926, %v946
    %v966 = vadd.f32 %v927, %v946
    %v967 = vadd.f32 %v928, %v946
    %v968 = vadd.f32 %v929, %v946
    %v969 = vadd.f32 %v930, %v946
    %v970 = vadd.f32 %v931, %v946
    %v971 = vadd.f32 %v932, %v946
    %v972 = vadd.f32 %v933, %v946
    %v973 = vadd.f32 %v934, %v946
    %v974 = vadd.f32 %v935, %v946
    %v975 = vadd.f32 %v936, %v946
    %v976 = vadd.f32 %v937, %v946
    %v977 = vadd.f32 %v938, %v946
    %v978 = vadd.f32 %v939, %v946
    %v979 = vadd.f32 %v940, %v946
    %v980 = vmax.f32 %v948, 0.0
    %v981 = vmax.f32 %v949, 0.0
    %v982 = vmax.f32 %v950, 0.0
    %v983 = vmax.f32 %v951, 0.0
    %v984 = vmax.f32 %v952, 0.0
    %v985 = vmax.f32 %v953, 0.0
    %v986 = vmax.f32 %v954, 0.0
    %v987 = vmax.f32 %v955, 0.0
    %v988 = vmax.f32 %v956, 0.0
    %v989 = vmax.f32 %v957, 0.0
    %v990 = vmax.f32 %v958, 0.0
    %v991 = vmax.f32 %v959, 0.0
    %v992 = vmax.f32 %v960, 0.0
    %v993 = vmax.f32 %v961, 0.0
    %v994 = vmax.f32 %v962, 0.0
    %v995 = vmax.f32 %v963, 0.0
    %v996 = vmax.f32 %v964, 0.0
    %v997 = vmax.f32 %v965, 0.0
    %v998 = vmax.f32 %v966, 0.0
    %v999 = vmax.f32 %v967, 0.0
    %v1000 = vmax.f32 %v968, 0.0
    %v1001 = vmax.f32 %v969, 0.0
    %v1002 = vmax.f32 %v970, 0.0
    %v1003 = vmax.f32 %v971, 0.0
    %v1004 = vmax.f32 %v972, 0.0
    %v1005 = vmax.f32 %v973, 0.0
    %v1006 = vmax.f32 %v974, 0.0
    %v1007 = vmax.f32 %v975, 0.0
    %v1008 = vmax.f32 %v976, 0.0
    %v1009 = vmax.f32 %v977, 0.0
    %v1010 = vmax.f32 %v978, 0.0
    %v1011 = vmax.f32 %v979, 0.0
    %v1012 = vadd.f32 %v90, %v122
    %v1013 = vadd.f32 %v91, %v123
    %v1014 = vadd.f32 %v92, %v124
    %v1015 = vadd.f32 %v93, %v125
    %v1016 = vadd.f32 %v94, %v126
    %v1017 = vadd.f32 %v95, %v127
    %v1018 = vadd.f32 %v96, %v128
    %v1019 = vadd.f32 %v97, %v129
    %v1020 = vadd.f32 %v98, %v130
    %v1021 = vadd.f32 %v99, %v131
    %v1022 = vadd.f32 %v100, %v132
    %v1023 = vadd.f32 %v101, %v133
    %v1024 = vadd.f32 %v102, %v134
    %v1025 = vadd.f32 %v103, %v135
    %v1026 = vadd.f32 %v104, %v136
    %v1027 = vadd.f32 %v105, %v137
    %v1028 = vadd.f32 %v106, %v138
    %v1029 = vadd.f32 %v107, %v139
    %v1030 = vadd.f32 %v108, %v140
    %v1031 = vadd.f32 %v109, %v141
    %v1032 = vadd.f32 %v110, %v142
    %v1033 = vadd.f32 %v111, %v143
    %v1034 = vadd.f32 %v112, %v144
    %v1035 = vadd.f32 %v113, %v145
    %v1036 = vadd.f32 %v114, %v146
    %v1037 = vadd.f32 %v115, %v147
    %v1038 = vadd.f32 %v116, %v148
    %v1039 = vadd.f32 %v117, %v149
    %v1040 = vadd.f32 %v118, %v150
    %v1041 = vadd.f32 %v119, %v151
    %v1042 = vadd.f32 %v120, %v152
    %v1043 = vadd.f32 %v121, %v153
    %v1044 = vmul.f32 %v90, %v122
    %v1045 = vmul.f32 %v91, %v123
    %v1046 = vmul.f32 %v92, %v124
    %v1047 = vmul.f32 %v93, %v125
    %v1048 = vmul.f32 %v94, %v126
    %v1049 = vmul.f32 %v95, %v127
    %v1050 = vmul.f32 %v96, %v128
    %v1051 = vmul.f32 %v97, %v129
    %v1052 = vmul.f32 %v98, %v130
    %v1053 = vmul.f32 %v99, %v131
    %v1054 = vmul.f32 %v100, %v132
    %v1055 = vmul.f32 %v101, %v133
    %v1056 = vmul.f32 %v102, %v134
    %v1057 = vmul.f32 %v103, %v135
    %v1058 = vmul.f32 %v104, %v136
    %v1059 = vmul.f32 %v105, %v137
    %v1060 = vmul.f32 %v106, %v138
    %v1061 = vmul.f32 %v107, %v139
    %v1062 = vmul.f32 %v108, %v140
    %v1063 = vmul.f32 %v109, %v141
    %v1064 = vmul.f32 %v110, %v142
    %v1065 = vmul.f32 %v111, %v143
    %v1066 = vmul.f32 %v112, %v144
    %v1067 = vmul.f32 %v113, %v145
    %v1068 = vmul.f32 %v114, %v146
    %v1069 = vmul.f32 %v115, %v147
    %v1070 = vmul.f32 %v116, %v148
    %v1071 = vmul.f32 %v117, %v149
    %v1072 = vmul.f32 %v118, %v150
    %v1073 = vmul.f32 %v119, %v151
    %v1074 = vmul.f32 %v120, %v152
    %v1075 = vmul.f32 %v121, %v153
    %v1076 = vmax.f32 %v90, %v122
    %v1077 = vmax.f32 %v91, %v123
    %v1078 = vmax.f32 %v92, %v124
    %v1079 = vmax.f32 %v93, %v125
    %v1080 = vmax.f32 %v94, %v126
    %v1081 = vmax.f32 %v95, %v127
    %v1082 = vmax.f32 %v96, %v128
    %v1083 = vmax.f32 %v97, %v129
    %v1084 = vmax.f32 %v98, %v130
    %v1085 = vmax.f32 %v99, %v131
    %v1086 = vmax.f32 %v100, %v132
    %v1087 = vmax.f32 %v101, %v133
    %v1088 = vmax.f32 %v102, %v134
    %v1089 = vmax.f32 %v103, %v135
    %v1090 = vmax.f32 %v104, %v136
    %v1091 = vmax.f32 %v105, %v137
    %v1092 = vmax.f32 %v106, %v138
    %v1093 = vmax.f32 %v107, %v139
    %v1094 = vmax.f32 %v108, %v140
    %v1095 = vmax.f32 %v109, %v141
    %v1096 = vmax.f32 %v110, %v142
    %v1097 = vmax.f32 %v111, %v143
    %v1098 = vmax.f32 %v112, %v144
    %v1099 = vmax.f32 %v113, %v145
    %v1100 = vmax.f32 %v114, %v146
    %v1101 = vmax.f32 %v115, %v147
    %v1102 = vmax.f32 %v116, %v148
    %v1103 = vmax.f32 %v117, %v149
    %v1104 = vmax.f32 %v118, %v150
    %v1105 = vmax.f32 %v119, %v151
    %v1106 = vmax.f32 %v120, %v152
    %v1107 = vmax.f32 %v121, %v153
    %v1108 = vmin.f32 %v90, %v122
    %v1109 = vmin.f32 %v91, %v123
    %v1110 = vmin.f32 %v92, %v124
    %v1111 = vmin.f32 %v93, %v125
    %v1112 = vmin.f32 %v94, %v126
    %v1113 = vmin.f32 %v95, %v127
    %v1114 = vmin.f32 %v96, %v128
    %v1115 = vmin.f32 %v97, %v129
    %v1116 = vmin.f32 %v98, %v130
    %v1117 = vmin.f32 %v99, %v131
    %v1118 = vmin.f32 %v100, %v132
    %v1119 = vmin.f32 %v101, %v133
    %v1120 = vmin.f32 %v102, %v134
    %v1121 = vmin.f32 %v103, %v135
    %v1122 = vmin.f32 %v104, %v136
    %v1123 = vmin.f32 %v105, %v137
    %v1124 = vmin.f32 %v106, %v138
    %v1125 = vmin.f32 %v107, %v139
    %v1126 = vmin.f32 %v108, %v140
    %v1127 = vmin.f32 %v109, %v141
    %v1128 = vmin.f32 %v110, %v142
    %v1129 = vmin.f32 %v111, %v143
    %v1130 = vmin.f32 %v112, %v144
    %v1131 = vmin.f32 %v113, %v145
    %v1132 = vmin.f32 %v114, %v146
    %v1133 = vmin.f32 %v115, %v147
    %v1134 = vmin.f32 %v116, %v148
    %v1135 = vmin.f32 %v117, %v149
    %v1136 = vmin.f32 %v118, %v150
    %v1137 = vmin.f32 %v119, %v151
    %v1138 = vmin.f32 %v120, %v152
    %v1139 = vmin.f32 %v121, %v153
    %v1140 = vadd.f32 %v1012, %v154
    %v1141 = vadd.f32 %v1013, %v155
    %v1142 = vadd.f32 %v1014, %v156
    %v1143 = vadd.f32 %v1015, %v157
    %v1144 = vadd.f32 %v1016, %v158
    %v1145 = vadd.f32 %v1017, %v159
    %v1146 = vadd.f32 %v1018, %v160
    %v1147 = vadd.f32 %v1019, %v161
    %v1148 = vadd.f32 %v1020, %v162
    %v1149 = vadd.f32 %v1021, %v163
    %v1150 = vadd.f32 %v1022, %v164
    %v1151 = vadd.f32 %v1023, %v165
    %v1152 = vadd.f32 %v1024, %v166
    %v1153 = vadd.f32 %v1025, %v167
    %v1154 = vadd.f32 %v1026, %v168
    %v1155 = vadd.f32 %v1027, %v169
    %v1156 = vadd.f32 %v1028, %v170
    %v1157 = vadd.f32 %v1029, %v171
    %v1158 = vadd.f32 %v1030, %v172
    %v1159 = vadd.f32 %v1031, %v173
    %v1160 = vadd.f32 %v1032, %v174
    %v1161 = vadd.f32 %v1033, %v175
    %v1162 = vadd.f32 %v1034, %v176
    %v1163 = vadd.f32 %v1035, %v177
    %v1164 = vadd.f32 %v1036, %v178
    %v1165 = vadd.f32 %v1037, %v179
    %v1166 = vadd.f32 %v1038, %v180
    %v1167 = vadd.f32 %v1039, %v181
    %v1168 = vadd.f32 %v1040, %v182
    %v1169 = vadd.f32 %v1041, %v183
    %v1170 = vadd.f32 %v1042, %v184
    %v1171 = vadd.f32 %v1043, %v185
    %v1172 = vmul.f32 %v1044, %v154
    %v1173 = vmul.f32 %v1045, %v155
    %v1174 = vmul.f32 %v1046, %v156
    %v1175 = vmul.f32 %v1047, %v157
    %v1176 = vmul.f32 %v1048, %v158
    %v1177 = vmul.f32 %v1049, %v159
    %v1178 = vmul.f32 %v1050, %v160
    %v1179 = vmul.f32 %v1051, %v161
    %v1180 = vmul.f32 %v1052, %v162
    %v1181 = vmul.f32 %v1053, %v163
    %v1182 = vmul.f32 %v1054, %v164
    %v1183 = vmul.f32 %v1055, %v165
    %v1184 = vmul.f32 %v1056, %v166
    %v1185 = vmul.f32 %v1057, %v167
    %v1186 = vmul.f32 %v1058, %v168
    %v1187 = vmul.f32 %v1059, %v169
    %v1188 = vmul.f32 %v1060, %v170
    %v1189 = vmul.f32 %v1061, %v171
    %v1190 = vmul.f32 %v1062, %v172
    %v1191 = vmul.f32 %v1063, %v173
    %v1192 = vmul.f32 %v1064, %v174
    %v1193 = vmul.f32 %v1065, %v175
    %v1194 = vmul.f32 %v1066, %v176
    %v1195 = vmul.f32 %v1067, %v177
    %v1196 = vmul.f32 %v1068, %v178
    %v1197 = vmul.f32 %v1069, %v179
    %v1198 = vmul.f32 %v1070, %v180
    %v1199 = vmul.f32 %v1071, %v181
    %v1200 = vmul.f32 %v1072, %v182
    %v1201 = vmul.f32 %v1073, %v183
    %v1202 = vmul.f32 %v1074, %v184
    %v1203 = vmul.f32 %v1075, %v185
    %v1204 = vmax.f32 %v1076, %v154
    %v1205 = vmax.f32 %v1077, %v155
    %v1206 = vmax.f32 %v1078, %v156
    %v1207 = vmax.f32 %v1079, %v157
    %v1208 = vmax.f32 %v1080, %v158
    %v1209 = vmax.f32 %v1081, %v159
    %v1210 = vmax.f32 %v1082, %v160
    %v1211 = vmax.f32 %v1083, %v161
    %v1212 = vmax.f32 %v1084, %v162
    %v1213 = vmax.f32 %v1085, %v163
    %v1214 = vmax.f32 %v1086, %v164
    %v1215 = vmax.f32 %v1087, %v165
    %v1216 = vmax.f32 %v1088, %v166
    %v1217 = vmax.f32 %v1089, %v167
    %v1218 = vmax.f32 %v1090, %v168
    %v1219 = vmax.f32 %v1091, %v169
    %v1220 = vmax.f32 %v1092, %v170
    %v1221 = vmax.f32 %v1093, %v171
    %v1222 = vmax.f32 %v1094, %v172
    %v1223 = vmax.f32 %v1095, %v173
    %v1224 = vmax.f32 %v1096, %v174
    %v1225 = vmax.f32 %v1097, %v175
    %v1226 = vmax.f32 %v1098, %v176
    %v1227 = vmax.f32 %v1099, %v177
    %v1228 = vmax.f32 %v1100, %v178
    %v1229 = vmax.f32 %v1101, %v179
    %v1230 = vmax.f32 %v1102, %v180
    %v1231 = vmax.f32 %v1103, %v181
    %v1232 = vmax.f32 %v1104, %v182
    %v1233 = vmax.f32 %v1105, %v183
    %v1234 = vmax.f32 %v1106, %v184
    %v1235 = vmax.f32 %v1107, %v185
    %v1236 = vmin.f32 %v1108, %v154
    %v1237 = vmin.f32 %v1109, %v155
    %v1238 = vmin.f32 %v1110, %v156
    %v1239 = vmin.f32 %v1111, %v157
    %v1240 = vmin.f32 %v1112, %v158
    %v1241 = vmin.f32 %v1113, %v159
    %v1242 = vmin.f32 %v1114, %v160
    %v1243 = vmin.f32 %v1115, %v161
    %v1244 = vmin.f32 %v1116, %v162
    %v1245 = vmin.f32 %v1117, %v163
    %v1246 = vmin.f32 %v1118, %v164
    %v1247 = vmin.f32 %v1119, %v165
    %v1248 = vmin.f32 %v1120, %v166
    %v1249 = vmin.f32 %v1121, %v167
    %v1250 = vmin.f32 %v1122, %v168
    %v1251 = vmin.f32 %v1123, %v169
    %v1252 = vmin.f32 %v1124, %v170
    %v1253 = vmin.f32 %v1125, %v171
    %v1254 = vmin.f32 %v1126, %v172
    %v1255 = vmin.f32 %v1127, %v173
    %v1256 = vmin.f32 %v1128, %v174
    %v1257 = vmin.f32 %v1129, %v175
    %v1258 = vmin.f32 %v1130, %v176
    %v1259 = vmin.f32 %v1131, %v177
    %v1260 = vmin.f32 %v1132, %v178
    %v1261 = vmin.f32 %v1133, %v179
    %v1262 = vmin.f32 %v1134, %v180
    %v1263 = vmin.f32 %v1135, %v181
    %v1264 = vmin.f32 %v1136, %v182
    %v1265 = vmin.f32 %v1137, %v183
    %v1266 = vmin.f32 %v1138, %v184
    %v1267 = vmin.f32 %v1139, %v185
    %s1268 = sld [smem:[#allocation2]]
    %v1269 = vstv %s1268
    %v1270 = vmul.f32 %v1269, %v1140
    %v1271 = vmul.f32 %v1269, %v1141
    %v1272 = vmul.f32 %v1269, %v1142
    %v1273 = vmul.f32 %v1269, %v1143
    %v1274 = vmul.f32 %v1269, %v1144
    %v1275 = vmul.f32 %v1269, %v1145
    %v1276 = vmul.f32 %v1269, %v1146
    %v1277 = vmul.f32 %v1269, %v1147
    %v1278 = vmul.f32 %v1269, %v1148
    %v1279 = vmul.f32 %v1269, %v1149
    %v1280 = vmul.f32 %v1269, %v1150
    %v1281 = vmul.f32 %v1269, %v1151
    %v1282 = vmul.f32 %v1269, %v1152
    %v1283 = vmul.f32 %v1269, %v1153
    %v1284 = vmul.f32 %v1269, %v1154
    %v1285 = vmul.f32 %v1269, %v1155
    %v1286 = vmul.f32 %v1269, %v1156
    %v1287 = vmul.f32 %v1269, %v1157
    %v1288 = vmul.f32 %v1269, %v1158
    %v1289 = vmul.f32 %v1269, %v1159
    %v1290 = vmul.f32 %v1269, %v1160
    %v1291 = vmul.f32 %v1269, %v1161
    %v1292 = vmul.f32 %v1269, %v1162
    %v1293 = vmul.f32 %v1269, %v1163
    %v1294 = vmul.f32 %v1269, %v1164
    %v1295 = vmul.f32 %v1269, %v1165
    %v1296 = vmul.f32 %v1269, %v1166
    %v1297 = vmul.f32 %v1269, %v1167
    %v1298 = vmul.f32 %v1269, %v1168
    %v1299 = vmul.f32 %v1269, %v1169
    %v1300 = vmul.f32 %v1269, %v1170
    %v1301 = vmul.f32 %v1269, %v1171
    %s1302 = sld [smem:[#allocation2 + $0x1]]
    %v1303 = vstv %s1302
    %v1304 = vmul.f32 %v1303, %v1172
    %v1305 = vmul.f32 %v1303, %v1173
    %v1306 = vmul.f32 %v1303, %v1174
    %v1307 = vmul.f32 %v1303, %v1175
    %v1308 = vmul.f32 %v1303, %v1176
    %v1309 = vmul.f32 %v1303, %v1177
    %v1310 = vmul.f32 %v1303, %v1178
    %v1311 = vmul.f32 %v1303, %v1179
    %v1312 = vmul.f32 %v1303, %v1180
    %v1313 = vmul.f32 %v1303, %v1181
    %v1314 = vmul.f32 %v1303, %v1182
    %v1315 = vmul.f32 %v1303, %v1183
    %v1316 = vmul.f32 %v1303, %v1184
    %v1317 = vmul.f32 %v1303, %v1185
    %v1318 = vmul.f32 %v1303, %v1186
    %v1319 = vmul.f32 %v1303, %v1187
    %v1320 = vmul.f32 %v1303, %v1188
    %v1321 = vmul.f32 %v1303, %v1189
    %v1322 = vmul.f32 %v1303, %v1190
    %v1323 = vmul.f32 %v1303, %v1191
    %v1324 = vmul.f32 %v1303, %v1192
    %v1325 = vmul.f32 %v1303, %v1193
    %v1326 = vmul.f32 %v1303, %v1194
    %v1327 = vmul.f32 %v1303, %v1195
    %v1328 = vmul.f32 %v1303, %v1196
    %v1329 = vmul.f32 %v1303, %v1197
    %v1330 = vmul.f32 %v1303, %v1198
    %v1331 = vmul.f32 %v1303, %v1199
    %v1332 = vmul.f32 %v1303, %v1200
    %v1333 = vmul.f32 %v1303, %v1201
    %v1334 = vmul.f32 %v1303, %v1202
    %v1335 = vmul.f32 %v1303, %v1203
    %v1336 = vadd.f32 %v1270, %v1304
    %v1337 = vadd.f32 %v1271, %v1305
    %v1338 = vadd.f32 %v1272, %v1306
    %v1339 = vadd.f32 %v1273, %v1307
    %v1340 = vadd.f32 %v1274, %v1308
    %v1341 = vadd.f32 %v1275, %v1309
    %v1342 = vadd.f32 %v1276, %v1310
    %v1343 = vadd.f32 %v1277, %v1311
    %v1344 = vadd.f32 %v1278, %v1312
    %v1345 = vadd.f32 %v1279, %v1313
    %v1346 = vadd.f32 %v1280, %v1314
    %v1347 = vadd.f32 %v1281, %v1315
    %v1348 = vadd.f32 %v1282, %v1316
    %v1349 = vadd.f32 %v1283, %v1317
    %v1350 = vadd.f32 %v1284, %v1318
    %v1351 = vadd.f32 %v1285, %v1319
    %v1352 = vadd.f32 %v1286, %v1320
    %v1353 = vadd.f32 %v1287, %v1321
    %v1354 = vadd.f32 %v1288, %v1322
    %v1355 = vadd.f32 %v1289, %v1323
    %v1356 = vadd.f32 %v1290, %v1324
    %v1357 = vadd.f32 %v1291, %v1325
    %v1358 = vadd.f32 %v1292, %v1326
    %v1359 = vadd.f32 %v1293, %v1327
    %v1360 = vadd.f32 %v1294, %v1328
    %v1361 = vadd.f32 %v1295, %v1329
    %v1362 = vadd.f32 %v1296, %v1330
    %v1363 = vadd.f32 %v1297, %v1331
    %v1364 = vadd.f32 %v1298, %v1332
    %v1365 = vadd.f32 %v1299, %v1333
    %v1366 = vadd.f32 %v1300, %v1334
    %v1367 = vadd.f32 %v1301, %v1335
    %s1368 = sld [smem:[#allocation2 + $0x2]]
    %v1369 = vstv %s1368
    %v1370 = vmul.f32 %v1369, %v1204
    %v1371 = vmul.f32 %v1369, %v1205
    %v1372 = vmul.f32 %v1369, %v1206
    %v1373 = vmul.f32 %v1369, %v1207
    %v1374 = vmul.f32 %v1369, %v1208
    %v1375 = vmul.f32 %v1369, %v1209
    %v1376 = vmul.f32 %v1369, %v1210
    %v1377 = vmul.f32 %v1369, %v1211
    %v1378 = vmul.f32 %v1369, %v1212
    %v1379 = vmul.f32 %v1369, %v1213
    %v1380 = vmul.f32 %v1369, %v1214
    %v1381 = vmul.f32 %v1369, %v1215
    %v1382 = vmul.f32 %v1369, %v1216
    %v1383 = vmul.f32 %v1369, %v1217
    %v1384 = vmul.f32 %v1369, %v1218
    %v1385 = vmul.f32 %v1369, %v1219
    %v1386 = vmul.f32 %v1369, %v1220
    %v1387 = vmul.f32 %v1369, %v1221
    %v1388 = vmul.f32 %v1369, %v1222
    %v1389 = vmul.f32 %v1369, %v1223
    %v1390 = vmul.f32 %v1369, %v1224
    %v1391 = vmul.f32 %v1369, %v1225
    %v1392 = vmul.f32 %v1369, %v1226
    %v1393 = vmul.f32 %v1369, %v1227
    %v1394 = vmul.f32 %v1369, %v1228
    %v1395 = vmul.f32 %v1369, %v1229
    %v1396 = vmul.f32 %v1369, %v1230
    %v1397 = vmul.f32 %v1369, %v1231
    %v1398 = vmul.f32 %v1369, %v1232
    %v1399 = vmul.f32 %v1369, %v1233
    %v1400 = vmul.f32 %v1369, %v1234
    %v1401 = vmul.f32 %v1369, %v1235
    %v1402 = vadd.f32 %v1336, %v1370
    %v1403 = vadd.f32 %v1337, %v1371
    %v1404 = vadd.f32 %v1338, %v1372
    %v1405 = vadd.f32 %v1339, %v1373
    %v1406 = vadd.f32 %v1340, %v1374
    %v1407 = vadd.f32 %v1341, %v1375
    %v1408 = vadd.f32 %v1342, %v1376
    %v1409 = vadd.f32 %v1343, %v1377
    %v1410 = vadd.f32 %v1344, %v1378
    %v1411 = vadd.f32 %v1345, %v1379
    %v1412 = vadd.f32 %v1346, %v1380
    %v1413 = vadd.f32 %v1347, %v1381
    %v1414 = vadd.f32 %v1348, %v1382
    %v1415 = vadd.f32 %v1349, %v1383
    %v1416 = vadd.f32 %v1350, %v1384
    %v1417 = vadd.f32 %v1351, %v1385
    %v1418 = vadd.f32 %v1352, %v1386
    %v1419 = vadd.f32 %v1353, %v1387
    %v1420 = vadd.f32 %v1354, %v1388
    %v1421 = vadd.f32 %v1355, %v1389
    %v1422 = vadd.f32 %v1356, %v1390
    %v1423 = vadd.f32 %v1357, %v1391
    %v1424 = vadd.f32 %v1358, %v1392
    %v1425 = vadd.f32 %v1359, %v1393
    %v1426 = vadd.f32 %v1360, %v1394
    %v1427 = vadd.f32 %v1361, %v1395
    %v1428 = vadd.f32 %v1362, %v1396
    %v1429 = vadd.f32 %v1363, %v1397
    %v1430 = vadd.f32 %v1364, %v1398
    %v1431 = vadd.f32 %v1365, %v1399
    %v1432 = vadd.f32 %v1366, %v1400
    %v1433 = vadd.f32 %v1367, %v1401
    %s1434 = sld [smem:[#allocation2 + $0x3]]
    %v1435 = vstv %s1434
    %v1436 = vmul.f32 %v1435, %v1236
    %v1437 = vmul.f32 %v1435, %v1237
    %v1438 = vmul.f32 %v1435, %v1238
    %v1439 = vmul.f32 %v1435, %v1239
    %v1440 = vmul.f32 %v1435, %v1240
    %v1441 = vmul.f32 %v1435, %v1241
    %v1442 = vmul.f32 %v1435, %v1242
    %v1443 = vmul.f32 %v1435, %v1243
    %v1444 = vmul.f32 %v1435, %v1244
    %v1445 = vmul.f32 %v1435, %v1245
    %v1446 = vmul.f32 %v1435, %v1246
    %v1447 = vmul.f32 %v1435, %v1247
    %v1448 = vmul.f32 %v1435, %v1248
    %v1449 = vmul.f32 %v1435, %v1249
    %v1450 = vmul.f32 %v1435, %v1250
    %v1451 = vmul.f32 %v1435, %v1251
    %v1452 = vmul.f32 %v1435, %v1252
    %v1453 = vmul.f32 %v1435, %v1253
    %v1454 = vmul.f32 %v1435, %v1254
    %v1455 = vmul.f32 %v1435, %v1255
    %v1456 = vmul.f32 %v1435, %v1256
    %v1457 = vmul.f32 %v1435, %v1257
    %v1458 = vmul.f32 %v1435, %v1258
    %v1459 = vmul.f32 %v1435, %v1259
    %v1460 = vmul.f32 %v1435, %v1260
    %v1461 = vmul.f32 %v1435, %v1261
    %v1462 = vmul.f32 %v1435, %v1262
    %v1463 = vmul.f32 %v1435, %v1263
    %v1464 = vmul.f32 %v1435, %v1264
    %v1465 = vmul.f32 %v1435, %v1265
    %v1466 = vmul.f32 %v1435, %v1266
    %v1467 = vmul.f32 %v1435, %v1267
    %v1468 = vadd.f32 %v1402, %v1436
    %v1469 = vadd.f32 %v1403, %v1437
    %v1470 = vadd.f32 %v1404, %v1438
    %v1471 = vadd.f32 %v1405, %v1439
    %v1472 = vadd.f32 %v1406, %v1440
    %v1473 = vadd.f32 %v1407, %v1441
    %v1474 = vadd.f32 %v1408, %v1442
    %v1475 = vadd.f32 %v1409, %v1443
    %v1476 = vadd.f32 %v1410, %v1444
    %v1477 = vadd.f32 %v1411, %v1445
    %v1478 = vadd.f32 %v1412, %v1446
    %v1479 = vadd.f32 %v1413, %v1447
    %v1480 = vadd.f32 %v1414, %v1448
    %v1481 = vadd.f32 %v1415, %v1449
    %v1482 = vadd.f32 %v1416, %v1450
    %v1483 = vadd.f32 %v1417, %v1451
    %v1484 = vadd.f32 %v1418, %v1452
    %v1485 = vadd.f32 %v1419, %v1453
    %v1486 = vadd.f32 %v1420, %v1454
    %v1487 = vadd.f32 %v1421, %v1455
    %v1488 = vadd.f32 %v1422, %v1456
    %v1489 = vadd.f32 %v1423, %v1457
    %v1490 = vadd.f32 %v1424, %v1458
    %v1491 = vadd.f32 %v1425, %v1459
    %v1492 = vadd.f32 %v1426, %v1460
    %v1493 = vadd.f32 %v1427, %v1461
    %v1494 = vadd.f32 %v1428, %v1462
    %v1495 = vadd.f32 %v1429, %v1463
    %v1496 = vadd.f32 %v1430, %v1464
    %v1497 = vadd.f32 %v1431, %v1465
    %v1498 = vadd.f32 %v1432, %v1466
    %v1499 = vadd.f32 %v1433, %v1467
    %s1500 = sld [smem:[#allocation2 + $0x4]]
    %v1501 = vstv %s1500
    %v1502 = vmul.f32 %v1501, %v980
    %v1503 = vmul.f32 %v1501, %v981
    %v1504 = vmul.f32 %v1501, %v982
    %v1505 = vmul.f32 %v1501, %v983
    %v1506 = vmul.f32 %v1501, %v984
    %v1507 = vmul.f32 %v1501, %v985
    %v1508 = vmul.f32 %v1501, %v986
    %v1509 = vmul.f32 %v1501, %v987
    %v1510 = vmul.f32 %v1501, %v988
    %v1511 = vmul.f32 %v1501, %v989
    %v1512 = vmul.f32 %v1501, %v990
    %v1513 = vmul.f32 %v1501, %v991
    %v1514 = vmul.f32 %v1501, %v992
    %v1515 = vmul.f32 %v1501, %v993
    %v1516 = vmul.f32 %v1501, %v994
    %v1517 = vmul.f32 %v1501, %v995
    %v1518 = vmul.f32 %v1501, %v996
    %v1519 = vmul.f32 %v1501, %v997
    %v1520 = vmul.f32 %v1501, %v998
    %v1521 = vmul.f32 %v1501, %v999
    %v1522 = vmul.f32 %v1501, %v1000
    %v1523 = vmul.f32 %v1501, %v1001
    %v1524 = vmul.f32 %v1501, %v1002
    %v1525 = vmul.f32 %v1501, %v1003
    %v1526 = vmul.f32 %v1501, %v1004
    %v1527 = vmul.f32 %v1501, %v1005
    %v1528 = vmul.f32 %v1501, %v1006
    %v1529 = vmul.f32 %v1501, %v1007
    %v1530 = vmul.f32 %v1501, %v1008
    %v1531 = vmul.f32 %v1501, %v1009
    %v1532 = vmul.f32 %v1501, %v1010
    %v1533 = vmul.f32 %v1501, %v1011
    %v1534 = vadd.f32 %v1468, %v1502
    %v1535 = vadd.f32 %v1469, %v1503
    %v1536 = vadd.f32 %v1470, %v1504
    %v1537 = vadd.f32 %v1471, %v1505
    %v1538 = vadd.f32 %v1472, %v1506
    %v1539 = vadd.f32 %v1473, %v1507
    %v1540 = vadd.f32 %v1474, %v1508
    %v1541 = vadd.f32 %v1475, %v1509
    %v1542 = vadd.f32 %v1476, %v1510
    %v1543 = vadd.f32 %v1477, %v1511
    %v1544 = vadd.f32 %v1478, %v1512
    %v1545 = vadd.f32 %v1479, %v1513
    %v1546 = vadd.f32 %v1480, %v1514
    %v1547 = vadd.f32 %v1481, %v1515
    %v1548 = vadd.f32 %v1482, %v1516
    %v1549 = vadd.f32 %v1483, %v1517
    %v1550 = vadd.f32 %v1484, %v1518
    %v1551 = vadd.f32 %v1485, %v1519
    %v1552 = vadd.f32 %v1486, %v1520
    %v1553 = vadd.f32 %v1487, %v1521
    %v1554 = vadd.f32 %v1488, %v1522
    %v1555 = vadd.f32 %v1489, %v1523
    %v1556 = vadd.f32 %v1490, %v1524
    %v1557 = vadd.f32 %v1491, %v1525
    %v1558 = vadd.f32 %v1492, %v1526
    %v1559 = vadd.f32 %v1493, %v1527
    %v1560 = vadd.f32 %v1494, %v1528
    %v1561 = vadd.f32 %v1495, %v1529
    %v1562 = vadd.f32 %v1496, %v1530
    %v1563 = vadd.f32 %v1497, %v1531
    %v1564 = vadd.f32 %v1498, %v1532
    %v1565 = vadd.f32 %v1499, %v1533
    %1566 = vst [vmem:[#allocation12] sm:$0xff] %v1534
    %1567 = vst [vmem:[#allocation12 + $0x8] sm:$0xff] %v1535
    %1568 = vst [vmem:[#allocation12 + $0x10] sm:$0xff] %v1536
    %1569 = vst [vmem:[#allocation12 + $0x18] sm:$0xff] %v1537
    %1570 = vst [vmem:[#allocation12 + $0x20] sm:$0xff] %v1538
    %1571 = vst [vmem:[#allocation12 + $0x28] sm:$0xff] %v1539
    %1572 = vst [vmem:[#allocation12 + $0x30] sm:$0xff] %v1540
    %1573 = vst [vmem:[#allocation12 + $0x38] sm:$0xff] %v1541
    %1574 = vst [vmem:[#allocation12 + $0x40] sm:$0xff] %v1542
    %1575 = vst [vmem:[#allocation12 + $0x48] sm:$0xff] %v1543
    %1576 = vst [vmem:[#allocation12 + $0x50] sm:$0xff] %v1544
    %1577 = vst [vmem:[#allocation12 + $0x58] sm:$0xff] %v1545
    %1578 = vst [vmem:[#allocation12 + $0x60] sm:$0xff] %v1546
    %1579 = vst [vmem:[#allocation12 + $0x68] sm:$0xff] %v1547
    %1580 = vst [vmem:[#allocation12 + $0x70] sm:$0xff] %v1548
    %1581 = vst [vmem:[#allocation12 + $0x78] sm:$0xff] %v1549
    %1582 = vst [vmem:[#allocation12 + $0x80] sm:$0xff] %v1550
    %1583 = vst [vmem:[#allocation12 + $0x88] sm:$0xff] %v1551
    %1584 = vst [vmem:[#allocation12 + $0x90] sm:$0xff] %v1552
    %1585 = vst [vmem:[#allocation12 + $0x98] sm:$0xff] %v1553
    %1586 = vst [vmem:[#allocation12 + $0xa0] sm:$0xff] %v1554
    %1587 = vst [vmem:[#allocation12 + $0xa8] sm:$0xff] %v1555
    %1588 = vst [vmem:[#allocation12 + $0xb0] sm:$0xff] %v1556
    %1589 = vst [vmem:[#allocation12 + $0xb8] sm:$0xff] %v1557
    %1590 = vst [vmem:[#allocation12 + $0xc0] sm:$0xff] %v1558
    %1591 = vst [vmem:[#allocation12 + $0xc8] sm:$0xff] %v1559
    %1592 = vst [vmem:[#allocation12 + $0xd0] sm:$0xff] %v1560
    %1593 = vst [vmem:[#allocation12 + $0xd8] sm:$0xff] %v1561
    %1594 = vst [vmem:[#allocation12 + $0xe0] sm:$0xff] %v1562
    %1595 = vst [vmem:[#allocation12 + $0xe8] sm:$0xff] %v1563
    %1596 = vst [vmem:[#allocation12 + $0xf0] sm:$0xff] %v1564
    %1597 = vst [vmem:[#allocation12 + $0xf8] sm:$0xff] %v1565
    // Predicated region
    $region46: #{tpu_custom_call.1} parent=1 // pred_check
      _
    $region47: #{tpu_custom_call.1} parent=1 // pred_check_branch
      %1599 = sbr.rel (0) target = $region49
    $region48: #{tpu_custom_call.1} parent=1 // pred_region
      %s1601 = ssub.s32 4096, 4096
      %1602 = vsyncadd [#allocation4], %s1601
      %s1603 = sshll.u32 [#allocation12], 4
      %s1604 = int_to_ptr.vmem [resolvable:$true] %s1603
      %1609 = dma.vmem_to_hbm [thread:$0]  %s1604, 4096, %s6, [#allocation4], 128, 128, 8
    $region49: #{tpu_custom_call.1} parent=1 // pred_fallthru
      _
    // Predicated region
    $region50: #{tpu_custom_call.1} parent=1 // pred_check
      _
    $region51: #{tpu_custom_call.1} parent=1 // pred_check_branch
      %1611 = sbr.rel (0) target = $region53
    $region52: #{tpu_custom_call.1} parent=1 // pred_region
      %1612 = dma.done [#allocation4], 4096
    $region53: #{tpu_custom_call.1} parent=1 // pred_fallthru
      _
    %1613 = vsyncpa [#allocation3], 1
    %1614 = vsyncpa [#allocation8], 1
    %1615 = vsyncpa [#allocation11], 1
    %1616 = vsyncpa [#allocation4], 1
    %1617 = vsyncpa [#allocation5], 1

</llo_original>
